<compile_context>
chip_gen: v7x
topology: tpu7x:2x2x1
jax: 0.10.0
libtpu: 0.0.40
codegen_flags: <defaults>
</compile_context>

<pallas_src>
import math

import jax
import jax.numpy as jnp
from jax import lax
from jax.experimental import pallas as pl
from jax.experimental.pallas import tpu as pltpu

PI = math.pi
SHIFT = math.log(2.0)          # ShiftedSoftplus shift
LANE = 128
SUBLANE = 8


def _round_up(v, m):
    return ((v + m - 1) // m) * m


def _cdiv(a, b):
    return -(-a // b)


def _ssp(v):
    # shifted softplus, numerically stable: softplus(v) - log(2)
    # (log form instead of log1p for guaranteed Mosaic lowering; |err| < 6e-8)
    return jnp.maximum(v, 0.0) + jnp.log(1.0 + jnp.exp(-jnp.abs(v))) - SHIFT


# ---------------------------------------------------------------------------
# Pallas kernel: per-edge filter MLP + message + scatter-add aggregation.
# grid = (n_par, edge_blocks); each parallel slice accumulates its own
# [N_pad, F] partial aggregate resident in the output block.
# ---------------------------------------------------------------------------
def _cfconv_agg_kernel(dst_ref, ea_ref, xj_ref,
                       w0_ref, b0_ref, w2_ref, b2_ref,
                       out_ref):
    eb = pl.program_id(1)

    @pl.when(eb == 0)
    def _init():
        out_ref[...] = jnp.zeros_like(out_ref)

    # filter-generating MLP: Linear -> ssp -> Linear                 [TE, F]
    h = jnp.dot(ea_ref[...], w0_ref[...],
                preferred_element_type=jnp.float32) + b0_ref[...]
    h = _ssp(h)
    w_filt = jnp.dot(h, w2_ref[...],
                     preferred_element_type=jnp.float32) + b2_ref[...]

    # message: (cutoff-scaled, pre-gathered) x1[src] * W             [TE, F]
    msg = xj_ref[...] * w_filt

    # scatter-add via on-chip one-hot (1-D node iota == lane-dense dst) -> MXU
    n_pad = out_ref.shape[0]
    node_iota = lax.broadcasted_iota(jnp.int32, (n_pad, 1), 0)
    scat = (node_iota == dst_ref[...]).astype(jnp.float32)         # [N_pad, TE]
    out_ref[...] += jnp.dot(scat, msg, preferred_element_type=jnp.float32)


# ---------------------------------------------------------------------------
# Wrapper
# ---------------------------------------------------------------------------
def _vmem_capacity_bytes():
    try:
        return int(pltpu.get_tpu_info().vmem_capacity_bytes)
    except Exception:
        return 64 << 20        # conservative default (v7x per-core VMEM)


def _pick_edge_tile(E, N_pad, G, F):
    """Largest 128-multiple edge tile whose per-step VMEM footprint
    (double-buffered edge streams + [N_pad, tile] one-hot & temps) stays
    within ~half of this chip's VMEM."""
    budget = (_vmem_capacity_bytes() * 7) // 8
    lanes = lambda n: _round_up(n, LANE)
    per_edge = (2 * 4 * (SUBLANE + lanes(G) + lanes(F))     # streams (x2 bufs)
                + 4 * (3 * N_pad + lanes(F)))               # one-hot/temps/msg
    tile = (budget // 2) // max(per_edge, 1)
    tile = max(LANE, (tile // LANE) * LANE)
    tile = min(tile, 2048)
    return min(tile, _round_up(max(E, 1), LANE))


def interaction_block(x, edge_index, edge_weight, edge_attr, params, cutoff,
                      *, edge_tile=None):
    """x: [N, H] f32; edge_index: [2, E] int32; edge_weight: [E]; edge_attr: [E, G]."""
    f32 = jnp.float32
    N, H = x.shape
    E = edge_index.shape[1]
    G = edge_attr.shape[1]
    F = params["mlp0_w"].shape[0]          # num_filters

    N_pad = _round_up(max(N, SUBLANE), SUBLANE)

    if edge_tile is None:
        edge_tile = _pick_edge_tile(E, N_pad, G, F)
    edge_tile = _round_up(edge_tile, LANE)

    total_blocks = _cdiv(E, edge_tile)
    n_par = 2 if total_blocks >= 2 else 1        # megacore split of edge axis
    bpc = _cdiv(total_blocks, n_par)             # edge blocks per parallel slice
    E_pad = n_par * bpc * edge_tile

    # ---- XLA prologue: hoisted lin1, gather, cutoff envelope ----
    src = edge_index[0].astype(jnp.int32)
    dst = edge_index[1].astype(jnp.int32)
    x1 = jnp.dot(x.astype(f32), params["lin1_w"].T.astype(f32))          # [N, F]
    c = 0.5 * (jnp.cos(edge_weight.astype(f32) * (PI / cutoff)) + 1.0)   # [E]
    xj = x1[src] * c[:, None]                                            # [E, F]

    # padded edges contribute exactly zero (zero x_j rows, dst -> node 0)
    xj_p = jnp.pad(xj, ((0, E_pad - E), (0, 0)))
    ea_p = jnp.pad(edge_attr.astype(f32), ((0, E_pad - E), (0, 0)))
    dst_p = jnp.pad(dst, (0, E_pad - E)).reshape(1, E_pad)

    w0 = params["mlp0_w"].T.astype(f32)                  # [G, F]
    b0 = params["mlp0_b"].reshape(1, F).astype(f32)
    w2 = params["mlp2_w"].T.astype(f32)                  # [F, F]
    b2 = params["mlp2_b"].reshape(1, F).astype(f32)

    # ---- specs ----
    dst_spec = pl.BlockSpec((1, edge_tile), lambda p, eb: (0, p * bpc + eb))
    ea_spec = pl.BlockSpec((edge_tile, G), lambda p, eb: (p * bpc + eb, 0))
    xj_spec = pl.BlockSpec((edge_tile, F), lambda p, eb: (p * bpc + eb, 0))
    out_spec = pl.BlockSpec((None, N_pad, F), lambda p, eb: (p, 0, 0))

    def const_spec(shape, single_buffer):
        if single_buffer:
            # grid-invariant operand: single buffer is enough
            return pl.BlockSpec(shape, lambda p, eb: (0, 0),
                                pipeline_mode=pl.Buffered(1))
        return pl.BlockSpec(shape, lambda p, eb: (0, 0))

    # ---- VMEM budget (includes the one-hot intermediates) & cost ----
    lanes = lambda n: _round_up(n, LANE)
    stream_bytes = 2 * 4 * edge_tile * (SUBLANE + lanes(G) + lanes(F))
    interm_bytes = 4 * edge_tile * (3 * N_pad + 2 * lanes(F))
    out_bytes = 2 * 4 * N_pad * lanes(F)
    weight_bytes = 4 * lanes(F) * (G + 2 * F + 2)
    needed = stream_bytes + interm_bytes + out_bytes + weight_bytes
    vmem_cap = _vmem_capacity_bytes()
    vmem_limit = int(min(max(needed * 3 // 2, 32 << 20), (vmem_cap * 7) // 8))

    cost = pl.CostEstimate(
        flops=2 * E_pad * (G * F + F * F + N_pad * F),
        transcendentals=2 * E_pad * F,
        bytes_accessed=4 * (E_pad * (1 + G + F) + n_par * N_pad * F
                            + G * F + F * F + 2 * F),
    )

    def run(single_buffer):
        call = pl.pallas_call(
            _cfconv_agg_kernel,
            out_shape=jax.ShapeDtypeStruct((n_par, N_pad, F), f32),
            grid_spec=pltpu.PrefetchScalarGridSpec(
                num_scalar_prefetch=0,
                grid=(n_par, bpc),
                in_specs=[
                    dst_spec,                                # dst row   [1, E]
                    ea_spec,                                 # edge_attr [E, G]
                    xj_spec,                                 # x1[src]*c [E, F]
                    const_spec((G, F), single_buffer),       # mlp0 W^T
                    const_spec((1, F), single_buffer),       # mlp0 b
                    const_spec((F, F), single_buffer),       # mlp2 W^T
                    const_spec((1, F), single_buffer),       # mlp2 b
                ],
                out_specs=out_spec,
            ),
            compiler_params=pltpu.CompilerParams(
                dimension_semantics=("parallel", "arbitrary"),
                vmem_limit_bytes=vmem_limit,
            ),
            cost_estimate=cost,
        )
        return call(dst_p, ea_p, xj_p, w0, b0, w2, b2)

    try:
        agg_parts = run(single_buffer=True)
    except Exception:
        # pl.Buffered(1) unsupported on this jax/libtpu: fall back to default
        # double buffering of the (few-KiB) invariant weight operands.
        agg_parts = run(single_buffer=False)

    # ---- XLA epilogue: sum per-slice partials, lin2 -> ssp -> lin ----
    agg = jnp.sum(agg_parts, axis=0)[:N]                                 # [N, F]
    x2 = _ssp(jnp.dot(agg, params["lin2_w"].T.astype(f32))
              + params["lin2_b"].astype(f32))
    out = jnp.dot(x2, params["lin_w"].T.astype(f32)) + params["lin_b"].astype(f32)
    return out


# ---------------------------------------------------------------------------
# Params / reference / test
# ---------------------------------------------------------------------------
def xavier_uniform(key, out_f, in_f):
    bound = math.sqrt(6.0 / (in_f + out_f))
    return jax.random.uniform(key, (out_f, in_f), jnp.float32, -bound, bound)


def init_params(key, hidden, num_gaussians, num_filters):
    keys = jax.random.split(key, 5)
    return {
        "mlp0_w": xavier_uniform(keys[0], num_filters, num_gaussians),
        "mlp0_b": jnp.zeros((num_filters,), jnp.float32),
        "mlp2_w": xavier_uniform(keys[1], num_filters, num_filters),
        "mlp2_b": jnp.zeros((num_filters,), jnp.float32),
        "lin1_w": xavier_uniform(keys[2], num_filters, hidden),
        "lin2_w": xavier_uniform(keys[3], hidden, num_filters),
        "lin2_b": jnp.zeros((hidden,), jnp.float32),
        "lin_w": xavier_uniform(keys[4], hidden, hidden),
        "lin_b": jnp.zeros((hidden,), jnp.float32),
    }


def reference(x, edge_index, edge_weight, edge_attr, params, cutoff):
    # pure-JAX reference for correctness check
    h = _ssp(edge_attr @ params["mlp0_w"].T + params["mlp0_b"])
    w_filt = h @ params["mlp2_w"].T + params["mlp2_b"]
    c = 0.5 * (jnp.cos(edge_weight * PI / cutoff) + 1.0)
    W = w_filt * c[:, None]
    x1 = x @ params["lin1_w"].T
    msg = x1[edge_index[0]] * W
    agg = jnp.zeros((x.shape[0], msg.shape[1]), msg.dtype).at[edge_index[1]].add(msg)
    x2 = _ssp(agg @ params["lin2_w"].T + params["lin2_b"])
    return x2 @ params["lin_w"].T + params["lin_b"]


if __name__ == "__main__":
    hidden, num_gaussians, num_filters, cutoff = 32, 16, 32, 10.0
    N, E = 10, 300   # non-aligned sizes: exercises padding, multi-block edge
                     # grid and the 2-way parallel split

    key = jax.random.PRNGKey(0)
    kp, kx, ke, kw, ka = jax.random.split(key, 5)
    params = init_params(kp, hidden, num_gaussians, num_filters)

    x = jax.random.normal(kx, (N, hidden), jnp.float32)
    edge_index = jax.random.randint(ke, (2, E), 0, N, dtype=jnp.int32)
    edge_weight = jax.random.uniform(kw, (E,), jnp.float32, 0.0, cutoff)
    edge_attr = jax.random.normal(ka, (E, num_gaussians), jnp.float32)

    out = interaction_block(x, edge_index, edge_weight, edge_attr, params,
                            cutoff, edge_tile=128)
    out = jax.block_until_ready(out)

    ref = reference(x, edge_index, edge_weight, edge_attr, params, cutoff)
    assert out.shape == (N, hidden)
    assert jnp.allclose(out, ref, atol=1e-4, rtol=1e-4), "mismatch vs reference"
    print("KERNEL_OK")
</pallas_src>

<mosaic_0001>
module attributes {stable_mosaic.version = 11 : i64} {
  func.func @_cfconv_agg_kernel(%arg0: i32, %arg1: i32, %arg2: memref<1x128xi32, #tpu.memory_space<vmem>>, %arg3: memref<128x16xf32, #tpu.memory_space<vmem>>, %arg4: memref<128x32xf32, #tpu.memory_space<vmem>>, %arg5: memref<16x32xf32, #tpu.memory_space<vmem>>, %arg6: memref<1x32xf32, #tpu.memory_space<vmem>>, %arg7: memref<32x32xf32, #tpu.memory_space<vmem>>, %arg8: memref<1x32xf32, #tpu.memory_space<vmem>>, %arg9: memref<1x16x32xf32, #tpu.memory_space<vmem>>) attributes {dimension_semantics = [#tpu.dimension_semantics<parallel>, #tpu.dimension_semantics<arbitrary>], iteration_bounds = array<i64: 2, 2>, scalar_prefetch = 0 : i64, scratch_operands = 0 : i64, tpu.core_type = #tpu.core_type<tc>, window_params = [{transform_indices = @transform_0, window_bounds = array<i64: 1, 128>}, {transform_indices = @transform_1, window_bounds = array<i64: 128, 16>}, {transform_indices = @transform_2, window_bounds = array<i64: 128, 32>}, {pipeline_mode = #tpu.pipeline_mode<synchronous>, transform_indices = @transform_3, window_bounds = array<i64: 16, 32>}, {pipeline_mode = #tpu.pipeline_mode<synchronous>, transform_indices = @transform_4, window_bounds = array<i64: 1, 32>}, {pipeline_mode = #tpu.pipeline_mode<synchronous>, transform_indices = @transform_5, window_bounds = array<i64: 32, 32>}, {pipeline_mode = #tpu.pipeline_mode<synchronous>, transform_indices = @transform_6, window_bounds = array<i64: 1, 32>}, {transform_indices = @transform_7, window_bounds = array<i64: 1, 16, 32>}]} {
    %c0_i32 = arith.constant 0 : i32
    %0 = arith.cmpi eq, %arg1, %c0_i32 : i32
    %1 = arith.extui %0 : i1 to i32
    %c0_i32_0 = arith.constant 0 : i32
    %2 = arith.cmpi ne, %1, %c0_i32_0 : i32
    scf.if %2 {
      %cst_26 = arith.constant 0.000000e+00 : f32
      %42 = vector.broadcast %cst_26 : f32 to vector<16x32xf32>
      %c0_27 = arith.constant 0 : index
      %c0_28 = arith.constant 0 : index
      %c0_29 = arith.constant 0 : index
      %43 = vector.load %arg9[%c0_27, %c0_28, %c0_29] : memref<1x16x32xf32, #tpu.memory_space<vmem>>, vector<1x16x32xf32>
      %44 = vector.shape_cast %43 : vector<1x16x32xf32> to vector<16x32xf32>
      %45 = vector.shape_cast %42 : vector<16x32xf32> to vector<1x16x32xf32>
      tpu.vector_store %arg9[%c0_27, %c0_28, %c0_29], %45 {strides = array<i32>} : memref<1x16x32xf32, #tpu.memory_space<vmem>>, vector<1x16x32xf32>,
    } else {
    }
    %c0 = arith.constant 0 : index
    %c0_1 = arith.constant 0 : index
    %3 = vector.load %arg3[%c0, %c0_1] : memref<128x16xf32, #tpu.memory_space<vmem>>, vector<128x16xf32>
    %c0_2 = arith.constant 0 : index
    %c0_3 = arith.constant 0 : index
    %4 = vector.load %arg5[%c0_2, %c0_3] : memref<16x32xf32, #tpu.memory_space<vmem>>, vector<16x32xf32>
    %cst = arith.constant dense<0.000000e+00> : vector<128x32xf32>
    %5 = tpu.matmul %3, %4, %cst {dimension_numbers = #tpu.dot_dimension_numbers<[1], [0], [0], [1], [0, 0, 1, 1], [], []>} : vector<128x16xf32>, vector<16x32xf32>, vector<128x32xf32> -> vector<128x32xf32>
    %c0_4 = arith.constant 0 : index
    %c0_5 = arith.constant 0 : index
    %6 = vector.load %arg6[%c0_4, %c0_5] : memref<1x32xf32, #tpu.memory_space<vmem>>, vector<1x32xf32>
    %7 = vector.broadcast %6 : vector<1x32xf32> to vector<128x32xf32>
    %8 = arith.addf %5, %7 : vector<128x32xf32>
    %cst_6 = arith.constant 0.000000e+00 : f32
    %9 = vector.broadcast %cst_6 : f32 to vector<128x32xf32>
    %10 = arith.maximumf %8, %9 : vector<128x32xf32>
    %11 = math.absf %8 : vector<128x32xf32>
    %cst_7 = arith.constant 0.000000e+00 : f32
    %12 = vector.broadcast %cst_7 : f32 to vector<128x32xf32>
    %13 = arith.subf %12, %11 : vector<128x32xf32>
    %14 = math.exp %13 : vector<128x32xf32>
    %cst_8 = arith.constant 1.000000e+00 : f32
    %15 = vector.broadcast %cst_8 : f32 to vector<128x32xf32>
    %16 = arith.addf %15, %14 : vector<128x32xf32>
    %17 = math.log %16 : vector<128x32xf32>
    %18 = arith.addf %10, %17 : vector<128x32xf32>
    %cst_9 = arith.constant 0.693147182 : f32
    %19 = vector.broadcast %cst_9 : f32 to vector<128x32xf32>
    %20 = arith.subf %18, %19 : vector<128x32xf32>
    %c0_10 = arith.constant 0 : index
    %c0_11 = arith.constant 0 : index
    %21 = vector.load %arg7[%c0_10, %c0_11] : memref<32x32xf32, #tpu.memory_space<vmem>>, vector<32x32xf32>
    %cst_12 = arith.constant dense<0.000000e+00> : vector<128x32xf32>
    %22 = tpu.matmul %20, %21, %cst_12 {dimension_numbers = #tpu.dot_dimension_numbers<[1], [0], [0], [1], [0, 0, 1, 1], [], []>} : vector<128x32xf32>, vector<32x32xf32>, vector<128x32xf32> -> vector<128x32xf32>
    %c0_13 = arith.constant 0 : index
    %c0_14 = arith.constant 0 : index
    %23 = vector.load %arg8[%c0_13, %c0_14] : memref<1x32xf32, #tpu.memory_space<vmem>>, vector<1x32xf32>
    %24 = vector.broadcast %23 : vector<1x32xf32> to vector<128x32xf32>
    %25 = arith.addf %22, %24 : vector<128x32xf32>
    %c0_15 = arith.constant 0 : index
    %c0_16 = arith.constant 0 : index
    %26 = vector.load %arg4[%c0_15, %c0_16] : memref<128x32xf32, #tpu.memory_space<vmem>>, vector<128x32xf32>
    %27 = arith.mulf %26, %25 : vector<128x32xf32>
    %28 = tpu.iota {dimensions = array<i32: 0>} : vector<16x1xi32>
    %c0_17 = arith.constant 0 : index
    %c0_18 = arith.constant 0 : index
    %29 = vector.load %arg2[%c0_17, %c0_18] : memref<1x128xi32, #tpu.memory_space<vmem>>, vector<1x128xi32>
    %30 = vector.broadcast %28 : vector<16x1xi32> to vector<16x128xi32>
    %31 = vector.broadcast %29 : vector<1x128xi32> to vector<16x128xi32>
    %32 = arith.cmpi eq, %30, %31 : vector<16x128xi32>
    %33 = arith.extui %32 : vector<16x128xi1> to vector<16x128xi32>
    %34 = arith.sitofp %33 : vector<16x128xi32> to vector<16x128xf32>
    %c0_19 = arith.constant 0 : index
    %c0_20 = arith.constant 0 : index
    %c0_21 = arith.constant 0 : index
    %35 = vector.load %arg9[%c0_19, %c0_20, %c0_21] : memref<1x16x32xf32, #tpu.memory_space<vmem>>, vector<1x16x32xf32>
    %36 = vector.shape_cast %35 : vector<1x16x32xf32> to vector<16x32xf32>
    %cst_22 = arith.constant dense<0.000000e+00> : vector<16x32xf32>
    %37 = tpu.matmul %34, %27, %cst_22 {dimension_numbers = #tpu.dot_dimension_numbers<[1], [0], [0], [1], [0, 0, 1, 1], [], []>} : vector<16x128xf32>, vector<128x32xf32>, vector<16x32xf32> -> vector<16x32xf32>
    %38 = arith.addf %36, %37 : vector<16x32xf32>
    %c0_23 = arith.constant 0 : index
    %c0_24 = arith.constant 0 : index
    %c0_25 = arith.constant 0 : index
    %39 = vector.load %arg9[%c0_23, %c0_24, %c0_25] : memref<1x16x32xf32, #tpu.memory_space<vmem>>, vector<1x16x32xf32>
    %40 = vector.shape_cast %39 : vector<1x16x32xf32> to vector<16x32xf32>
    %41 = vector.shape_cast %38 : vector<16x32xf32> to vector<1x16x32xf32>
    tpu.vector_store %arg9[%c0_23, %c0_24, %c0_25], %41 {strides = array<i32>} : memref<1x16x32xf32, #tpu.memory_space<vmem>>, vector<1x16x32xf32>,
    return
  }
  func.func @transform_0(%arg0: i32, %arg1: i32) -> (i32, i32) {
    %c2_i32 = arith.constant 2 : i32
    %0 = arith.muli %arg0, %c2_i32 : i32
    %1 = arith.addi %0, %arg1 : i32
    %c0_i32 = arith.constant 0 : i32
    %c0_i32_0 = arith.constant 0 : i32
    return %c0_i32, %1 : i32, i32
  }
  func.func @transform_1(%arg0: i32, %arg1: i32) -> (i32, i32) {
    %c2_i32 = arith.constant 2 : i32
    %0 = arith.muli %arg0, %c2_i32 : i32
    %1 = arith.addi %0, %arg1 : i32
    %c0_i32 = arith.constant 0 : i32
    %c0_i32_0 = arith.constant 0 : i32
    return %1, %c0_i32 : i32, i32
  }
  func.func @transform_2(%arg0: i32, %arg1: i32) -> (i32, i32) {
    %c2_i32 = arith.constant 2 : i32
    %0 = arith.muli %arg0, %c2_i32 : i32
    %1 = arith.addi %0, %arg1 : i32
    %c0_i32 = arith.constant 0 : i32
    %c0_i32_0 = arith.constant 0 : i32
    return %1, %c0_i32 : i32, i32
  }
  func.func @transform_3(%arg0: i32, %arg1: i32) -> (i32, i32) {
    %c0_i32 = arith.constant 0 : i32
    %c0_i32_0 = arith.constant 0 : i32
    %c0_i32_1 = arith.constant 0 : i32
    return %c0_i32, %c0_i32_0 : i32, i32
  }
  func.func @transform_4(%arg0: i32, %arg1: i32) -> (i32, i32) {
    %c0_i32 = arith.constant 0 : i32
    %c0_i32_0 = arith.constant 0 : i32
    %c0_i32_1 = arith.constant 0 : i32
    return %c0_i32, %c0_i32_0 : i32, i32
  }
  func.func @transform_5(%arg0: i32, %arg1: i32) -> (i32, i32) {
    %c0_i32 = arith.constant 0 : i32
    %c0_i32_0 = arith.constant 0 : i32
    %c0_i32_1 = arith.constant 0 : i32
    return %c0_i32, %c0_i32_0 : i32, i32
  }
  func.func @transform_6(%arg0: i32, %arg1: i32) -> (i32, i32) {
    %c0_i32 = arith.constant 0 : i32
    %c0_i32_0 = arith.constant 0 : i32
    %c0_i32_1 = arith.constant 0 : i32
    return %c0_i32, %c0_i32_0 : i32, i32
  }
  func.func @transform_7(%arg0: i32, %arg1: i32) -> (i32, i32, i32) {
    %c0_i32 = arith.constant 0 : i32
    %c0_i32_0 = arith.constant 0 : i32
    %c0_i32_1 = arith.constant 0 : i32
    return %arg0, %c0_i32, %c0_i32_0 : i32, i32, i32
  }
}

module attributes {stable_mosaic.version = 11 : i64} {
  func.func @_cfconv_agg_kernel(%arg0: i32, %arg1: i32, %arg2: memref<1x128xi32, #tpu.memory_space<vmem>>, %arg3: memref<128x16xf32, #tpu.memory_space<vmem>>, %arg4: memref<128x32xf32, #tpu.memory_space<vmem>>, %arg5: memref<16x32xf32, #tpu.memory_space<vmem>>, %arg6: memref<1x32xf32, #tpu.memory_space<vmem>>, %arg7: memref<32x32xf32, #tpu.memory_space<vmem>>, %arg8: memref<1x32xf32, #tpu.memory_space<vmem>>, %arg9: memref<1x16x32xf32, #tpu.memory_space<vmem>>) attributes {dimension_semantics = [#tpu.dimension_semantics<parallel>, #tpu.dimension_semantics<arbitrary>], iteration_bounds = array<i64: 2, 2>, scalar_prefetch = 0 : i64, scratch_operands = 0 : i64, tpu.core_type = #tpu.core_type<tc>, window_params = [{transform_indices = @transform_0, window_bounds = array<i64: 1, 128>}, {transform_indices = @transform_1, window_bounds = array<i64: 128, 16>}, {transform_indices = @transform_2, window_bounds = array<i64: 128, 32>}, {pipeline_mode = #tpu.pipeline_mode<synchronous>, transform_indices = @transform_3, window_bounds = array<i64: 16, 32>}, {pipeline_mode = #tpu.pipeline_mode<synchronous>, transform_indices = @transform_4, window_bounds = array<i64: 1, 32>}, {pipeline_mode = #tpu.pipeline_mode<synchronous>, transform_indices = @transform_5, window_bounds = array<i64: 32, 32>}, {pipeline_mode = #tpu.pipeline_mode<synchronous>, transform_indices = @transform_6, window_bounds = array<i64: 1, 32>}, {transform_indices = @transform_7, window_bounds = array<i64: 1, 16, 32>}]} {
    %c0_i32 = arith.constant 0 : i32
    %0 = arith.cmpi eq, %arg1, %c0_i32 : i32
    %1 = arith.extui %0 : i1 to i32
    %c0_i32_0 = arith.constant 0 : i32
    %2 = arith.cmpi ne, %1, %c0_i32_0 : i32
    scf.if %2 {
      %cst_26 = arith.constant 0.000000e+00 : f32
      %42 = vector.broadcast %cst_26 : f32 to vector<16x32xf32>
      %c0_27 = arith.constant 0 : index
      %c0_28 = arith.constant 0 : index
      %c0_29 = arith.constant 0 : index
      %43 = vector.load %arg9[%c0_27, %c0_28, %c0_29] : memref<1x16x32xf32, #tpu.memory_space<vmem>>, vector<1x16x32xf32>
      %44 = vector.shape_cast %43 : vector<1x16x32xf32> to vector<16x32xf32>
      %45 = vector.shape_cast %42 : vector<16x32xf32> to vector<1x16x32xf32>
      tpu.vector_store %arg9[%c0_27, %c0_28, %c0_29], %45 {strides = array<i32>} : memref<1x16x32xf32, #tpu.memory_space<vmem>>, vector<1x16x32xf32>,
    } else {
    }
    %c0 = arith.constant 0 : index
    %c0_1 = arith.constant 0 : index
    %3 = vector.load %arg3[%c0, %c0_1] : memref<128x16xf32, #tpu.memory_space<vmem>>, vector<128x16xf32>
    %c0_2 = arith.constant 0 : index
    %c0_3 = arith.constant 0 : index
    %4 = vector.load %arg5[%c0_2, %c0_3] : memref<16x32xf32, #tpu.memory_space<vmem>>, vector<16x32xf32>
    %cst = arith.constant dense<0.000000e+00> : vector<128x32xf32>
    %5 = tpu.matmul %3, %4, %cst {dimension_numbers = #tpu.dot_dimension_numbers<[1], [0], [0], [1], [0, 0, 1, 1], [], []>} : vector<128x16xf32>, vector<16x32xf32>, vector<128x32xf32> -> vector<128x32xf32>
    %c0_4 = arith.constant 0 : index
    %c0_5 = arith.constant 0 : index
    %6 = vector.load %arg6[%c0_4, %c0_5] : memref<1x32xf32, #tpu.memory_space<vmem>>, vector<1x32xf32>
    %7 = vector.broadcast %6 : vector<1x32xf32> to vector<128x32xf32>
    %8 = arith.addf %5, %7 : vector<128x32xf32>
    %cst_6 = arith.constant 0.000000e+00 : f32
    %9 = vector.broadcast %cst_6 : f32 to vector<128x32xf32>
    %10 = arith.maximumf %8, %9 : vector<128x32xf32>
    %11 = math.absf %8 : vector<128x32xf32>
    %cst_7 = arith.constant 0.000000e+00 : f32
    %12 = vector.broadcast %cst_7 : f32 to vector<128x32xf32>
    %13 = arith.subf %12, %11 : vector<128x32xf32>
    %14 = math.exp %13 : vector<128x32xf32>
    %cst_8 = arith.constant 1.000000e+00 : f32
    %15 = vector.broadcast %cst_8 : f32 to vector<128x32xf32>
    %16 = arith.addf %15, %14 : vector<128x32xf32>
    %17 = math.log %16 : vector<128x32xf32>
    %18 = arith.addf %10, %17 : vector<128x32xf32>
    %cst_9 = arith.constant 0.693147182 : f32
    %19 = vector.broadcast %cst_9 : f32 to vector<128x32xf32>
    %20 = arith.subf %18, %19 : vector<128x32xf32>
    %c0_10 = arith.constant 0 : index
    %c0_11 = arith.constant 0 : index
    %21 = vector.load %arg7[%c0_10, %c0_11] : memref<32x32xf32, #tpu.memory_space<vmem>>, vector<32x32xf32>
    %cst_12 = arith.constant dense<0.000000e+00> : vector<128x32xf32>
    %22 = tpu.matmul %20, %21, %cst_12 {dimension_numbers = #tpu.dot_dimension_numbers<[1], [0], [0], [1], [0, 0, 1, 1], [], []>} : vector<128x32xf32>, vector<32x32xf32>, vector<128x32xf32> -> vector<128x32xf32>
    %c0_13 = arith.constant 0 : index
    %c0_14 = arith.constant 0 : index
    %23 = vector.load %arg8[%c0_13, %c0_14] : memref<1x32xf32, #tpu.memory_space<vmem>>, vector<1x32xf32>
    %24 = vector.broadcast %23 : vector<1x32xf32> to vector<128x32xf32>
    %25 = arith.addf %22, %24 : vector<128x32xf32>
    %c0_15 = arith.constant 0 : index
    %c0_16 = arith.constant 0 : index
    %26 = vector.load %arg4[%c0_15, %c0_16] : memref<128x32xf32, #tpu.memory_space<vmem>>, vector<128x32xf32>
    %27 = arith.mulf %26, %25 : vector<128x32xf32>
    %28 = tpu.iota {dimensions = array<i32: 0>} : vector<16x1xi32>
    %c0_17 = arith.constant 0 : index
    %c0_18 = arith.constant 0 : index
    %29 = vector.load %arg2[%c0_17, %c0_18] : memref<1x128xi32, #tpu.memory_space<vmem>>, vector<1x128xi32>
    %30 = vector.broadcast %28 : vector<16x1xi32> to vector<16x128xi32>
    %31 = vector.broadcast %29 : vector<1x128xi32> to vector<16x128xi32>
    %32 = arith.cmpi eq, %30, %31 : vector<16x128xi32>
    %33 = arith.extui %32 : vector<16x128xi1> to vector<16x128xi32>
    %34 = arith.sitofp %33 : vector<16x128xi32> to vector<16x128xf32>
    %c0_19 = arith.constant 0 : index
    %c0_20 = arith.constant 0 : index
    %c0_21 = arith.constant 0 : index
    %35 = vector.load %arg9[%c0_19, %c0_20, %c0_21] : memref<1x16x32xf32, #tpu.memory_space<vmem>>, vector<1x16x32xf32>
    %36 = vector.shape_cast %35 : vector<1x16x32xf32> to vector<16x32xf32>
    %cst_22 = arith.constant dense<0.000000e+00> : vector<16x32xf32>
    %37 = tpu.matmul %34, %27, %cst_22 {dimension_numbers = #tpu.dot_dimension_numbers<[1], [0], [0], [1], [0, 0, 1, 1], [], []>} : vector<16x128xf32>, vector<128x32xf32>, vector<16x32xf32> -> vector<16x32xf32>
    %38 = arith.addf %36, %37 : vector<16x32xf32>
    %c0_23 = arith.constant 0 : index
    %c0_24 = arith.constant 0 : index
    %c0_25 = arith.constant 0 : index
    %39 = vector.load %arg9[%c0_23, %c0_24, %c0_25] : memref<1x16x32xf32, #tpu.memory_space<vmem>>, vector<1x16x32xf32>
    %40 = vector.shape_cast %39 : vector<1x16x32xf32> to vector<16x32xf32>
    %41 = vector.shape_cast %38 : vector<16x32xf32> to vector<1x16x32xf32>
    tpu.vector_store %arg9[%c0_23, %c0_24, %c0_25], %41 {strides = array<i32>} : memref<1x16x32xf32, #tpu.memory_space<vmem>>, vector<1x16x32xf32>,
    return
  }
  func.func @transform_0(%arg0: i32, %arg1: i32) -> (i32, i32) {
    %c2_i32 = arith.constant 2 : i32
    %0 = arith.muli %arg0, %c2_i32 : i32
    %1 = arith.addi %0, %arg1 : i32
    %c0_i32 = arith.constant 0 : i32
    %c0_i32_0 = arith.constant 0 : i32
    return %c0_i32, %1 : i32, i32
  }
  func.func @transform_1(%arg0: i32, %arg1: i32) -> (i32, i32) {
    %c2_i32 = arith.constant 2 : i32
    %0 = arith.muli %arg0, %c2_i32 : i32
    %1 = arith.addi %0, %arg1 : i32
    %c0_i32 = arith.constant 0 : i32
    %c0_i32_0 = arith.constant 0 : i32
    return %1, %c0_i32 : i32, i32
  }
  func.func @transform_2(%arg0: i32, %arg1: i32) -> (i32, i32) {
    %c2_i32 = arith.constant 2 : i32
    %0 = arith.muli %arg0, %c2_i32 : i32
    %1 = arith.addi %0, %arg1 : i32
    %c0_i32 = arith.constant 0 : i32
    %c0_i32_0 = arith.constant 0 : i32
    return %1, %c0_i32 : i32, i32
  }
  func.func @transform_3(%arg0: i32, %arg1: i32) -> (i32, i32) {
    %c0_i32 = arith.constant 0 : i32
    %c0_i32_0 = arith.constant 0 : i32
    %c0_i32_1 = arith.constant 0 : i32
    return %c0_i32, %c0_i32_0 : i32, i32
  }
  func.func @transform_4(%arg0: i32, %arg1: i32) -> (i32, i32) {
    %c0_i32 = arith.constant 0 : i32
    %c0_i32_0 = arith.constant 0 : i32
    %c0_i32_1 = arith.constant 0 : i32
    return %c0_i32, %c0_i32_0 : i32, i32
  }
  func.func @transform_5(%arg0: i32, %arg1: i32) -> (i32, i32) {
    %c0_i32 = arith.constant 0 : i32
    %c0_i32_0 = arith.constant 0 : i32
    %c0_i32_1 = arith.constant 0 : i32
    return %c0_i32, %c0_i32_0 : i32, i32
  }
  func.func @transform_6(%arg0: i32, %arg1: i32) -> (i32, i32) {
    %c0_i32 = arith.constant 0 : i32
    %c0_i32_0 = arith.constant 0 : i32
    %c0_i32_1 = arith.constant 0 : i32
    return %c0_i32, %c0_i32_0 : i32, i32
  }
  func.func @transform_7(%arg0: i32, %arg1: i32) -> (i32, i32, i32) {
    %c0_i32 = arith.constant 0 : i32
    %c0_i32_0 = arith.constant 0 : i32
    %c0_i32_1 = arith.constant 0 : i32
    return %arg0, %c0_i32, %c0_i32_0 : i32, i32, i32
  }
}

</mosaic_0001>

<llo_original>
// kernel: tpu_custom_call.1
$region0: #{tpu_custom_call.1}
  #allocation0 [shape = 'u32[]', space=smem, size = 0x4, offset = 0x4, fixed_abs, tag = 'smem constant byte address 0x4 - core index']
  #allocation1 [shape = 'u32[144,128]{1,0:T(1,128)}', space=vmem, size = 0x12000, scoped, tag = 'internal scratch']
  %s0 = inlined_call_operand.vmem [shape: s32[1,512], index: 0, kind: input, shape index: {}]
  %s1 = inlined_call_operand.vmem [shape: f32[512,16], index: 1, kind: input, shape index: {}]
  %s2 = inlined_call_operand.vmem [shape: f32[512,32], index: 2, kind: input, shape index: {}]
  %s3 = inlined_call_operand.vmem [shape: f32[16,32], index: 3, kind: input, shape index: {}]
  %s4 = inlined_call_operand.vmem [shape: f32[1,32], index: 4, kind: input, shape index: {}]
  %s5 = inlined_call_operand.vmem [shape: f32[32,32], index: 5, kind: input, shape index: {}]
  %s6 = inlined_call_operand.vmem [shape: f32[1,32], index: 6, kind: input, shape index: {}]
  %s7 = inlined_call_operand.hbm [shape: f32[2,16,32], index: 7, kind: output, shape index: {}]
  %s8 = sld [smem:[#allocation0]]
  $region65: #{tpu_custom_call.1} parent=0
    _
  %s10 = ssub.s32 1, %s8
  %s11 = scalar_select 0, %s10, %s8
  $region1: #{tpu_custom_call.1} parent=0
    #allocation2 [shape = 'u8[16384]{0}', space=vmem, size = 0x4000, scoped, tag = 'output window, operand 0']
    #allocation3 [shape = 's32[2]{0}', space=sflag, size = 0x8, scoped, tag = 'scoped memory for tpu_custom_call.1']
    %12 = vsyncpa [#allocation3], 0
    %s13 = scalar_lea.sflag [#allocation3], 1
    %14 = vsyncpa %s13, 0
    loop: start=0, step=1, limit=6
    $region2: #{tpu_custom_call.1} parent=1 // loop_pre_header
      _
    $region3: #{tpu_custom_call.1} parent=1 // loop_header
      %s16 = sphi 0, %s20
      %p17 = scmp.ge.s32.totalorder %s16, 6
      %s23 = sphi 0, %s35
      %s24 = sphi 0, %s31
      %s25 = sphi 0, %s23
      %s26 = sphi 0, %s24
      %s27 = sphi 0, %s25
      %s28 = sphi 0, %s26
      %s42 = sphi 0, %s44
      %s45 = sphi 0, %s42
      %s46 = sphi 0, %s45
      %s62 = sphi 0, %s46
      %s72 = sphi 0, %s74
      %s75 = sphi 0, %s72
      %s76 = sphi 0, %s75
      %s92 = sphi 0, %s76
      %s102 = sphi 0, %s104
      %s105 = sphi 0, %s102
      %s106 = sphi 0, %s105
      %s122 = sphi 0, %s106
      %s126 = sphi 0, %s126
      %s128 = sphi 0, %s126
      %s129 = sphi 0, %s128
      %s143 = sphi 0, %s129
      %s147 = sphi 0, %s147
      %s149 = sphi 0, %s147
      %s150 = sphi 0, %s149
      %s164 = sphi 0, %s150
      %s168 = sphi 0, %s168
      %s170 = sphi 0, %s168
      %s171 = sphi 0, %s170
      %s185 = sphi 0, %s171
      %s189 = sphi 0, %s189
      %s191 = sphi 0, %s189
      %s192 = sphi 0, %s191
      %s206 = sphi 0, %s192
      %s212 = sphi 0, %s214
      %s215 = sphi 0, %s212
      %s216 = sphi 0, %s215
      %s232 = sphi 0, %s216
    $region4: #{tpu_custom_call.1} parent=1 // loop_header_branch
      %19 = sbr.rel (%p17) target = $region8
    $region5: #{tpu_custom_call.1} parent=1 // loop_body
      %s21 = ssub.s32 %s16, 1
      %s22 = ssub.s32 %s16, 2
      %s29 = sadd.s32 1, %s24
      %p30 = scmp.ge.s32.totalorder %s29, 2
      %s31 = scalar_select %p30, 0, %s29
      %s32 = sadd.s32 1, %s23
      %s33 = scalar_select %p30, %s32, %s23
      %p34 = scmp.ge.s32.totalorder %s33, 2
      %s35 = scalar_select %p34, 0, %s33
      %s36 = smul.u32 %s23, 2
      %s37 = sadd.s32 %s36, %s24
      %s38 = smul.u32 %s35, 2
      %s39 = sadd.s32 %s38, %s31
      %s40 = ssub.s32 %s37, %s39
      %p41 = scmp.eq.s32.totalorder %s40, 0
      %s43 = sadd.s32 %s42, 1
      %s44 = scalar_select %p41, %s42, %s43
      %p47 = pneg %p41
      %p48 = scmp.eq.s32.totalorder %s16, 3
      %p49 = por %p47, %p48
      %p50 = scmp.ne.s32.totalorder %s42, %s45
      %p51 = scmp.eq.s32.totalorder %s16, 0
      %p52 = por %p50, %p51
      %p53 = scmp.ne.s32.totalorder %s42, %s45
      %p54 = scmp.eq.s32.totalorder %s21, 3
      %p55 = por %p53, %p54
      %p56 = scmp.ne.s32.totalorder %s45, %s46
      %p57 = scmp.eq.s32.totalorder %s21, 0
      %p58 = por %p56, %p57
      %p59 = scmp.ne.s32.totalorder %s45, %s46
      %p60 = scmp.eq.s32.totalorder %s22, 3
      %p61 = por %p59, %p60
      %p63 = scmp.ne.s32.totalorder %s46, %s62
      %p64 = scmp.eq.s32.totalorder %s22, 0
      %p65 = por %p63, %p64
      %s66 = smul.u32 %s23, 2
      %s67 = sadd.s32 %s66, %s24
      %s68 = smul.u32 %s35, 2
      %s69 = sadd.s32 %s68, %s31
      %s70 = ssub.s32 %s67, %s69
      %p71 = scmp.eq.s32.totalorder %s70, 0
      %s73 = sadd.s32 %s72, 1
      %s74 = scalar_select %p71, %s72, %s73
      %p77 = pneg %p71
      %p78 = scmp.eq.s32.totalorder %s16, 3
      %p79 = por %p77, %p78
      %p80 = scmp.ne.s32.totalorder %s72, %s75
      %p81 = scmp.eq.s32.totalorder %s16, 0
      %p82 = por %p80, %p81
      %p83 = scmp.ne.s32.totalorder %s72, %s75
      %p84 = scmp.eq.s32.totalorder %s21, 3
      %p85 = por %p83, %p84
      %p86 = scmp.ne.s32.totalorder %s75, %s76
      %p87 = scmp.eq.s32.totalorder %s21, 0
      %p88 = por %p86, %p87
      %p89 = scmp.ne.s32.totalorder %s75, %s76
      %p90 = scmp.eq.s32.totalorder %s22, 3
      %p91 = por %p89, %p90
      %p93 = scmp.ne.s32.totalorder %s76, %s92
      %p94 = scmp.eq.s32.totalorder %s22, 0
      %p95 = por %p93, %p94
      %s96 = smul.u32 %s23, 2
      %s97 = sadd.s32 %s96, %s24
      %s98 = smul.u32 %s35, 2
      %s99 = sadd.s32 %s98, %s31
      %s100 = ssub.s32 %s97, %s99
      %p101 = scmp.eq.s32.totalorder %s100, 0
      %s103 = sadd.s32 %s102, 1
      %s104 = scalar_select %p101, %s102, %s103
      %p107 = pneg %p101
      %p108 = scmp.eq.s32.totalorder %s16, 3
      %p109 = por %p107, %p108
      %p110 = scmp.ne.s32.totalorder %s102, %s105
      %p111 = scmp.eq.s32.totalorder %s16, 0
      %p112 = por %p110, %p111
      %p113 = scmp.ne.s32.totalorder %s102, %s105
      %p114 = scmp.eq.s32.totalorder %s21, 3
      %p115 = por %p113, %p114
      %p116 = scmp.ne.s32.totalorder %s105, %s106
      %p117 = scmp.eq.s32.totalorder %s21, 0
      %p118 = por %p116, %p117
      %p119 = scmp.ne.s32.totalorder %s105, %s106
      %p120 = scmp.eq.s32.totalorder %s22, 3
      %p121 = por %p119, %p120
      %p123 = scmp.ne.s32.totalorder %s106, %s122
      %p124 = scmp.eq.s32.totalorder %s22, 0
      %p125 = por %p123, %p124
      %s127 = sadd.s32 %s126, 1
      %p130 = scmp.eq.s32.totalorder %s16, 3
      %p131 = scmp.ne.s32.totalorder %s126, %s128
      %p132 = scmp.eq.s32.totalorder %s16, 0
      %p133 = por %p131, %p132
      %p134 = scmp.ne.s32.totalorder %s126, %s128
      %p135 = scmp.eq.s32.totalorder %s21, 3
      %p136 = por %p134, %p135
      %p137 = scmp.ne.s32.totalorder %s128, %s129
      %p138 = scmp.eq.s32.totalorder %s21, 0
      %p139 = por %p137, %p138
      %p140 = scmp.ne.s32.totalorder %s128, %s129
      %p141 = scmp.eq.s32.totalorder %s22, 3
      %p142 = por %p140, %p141
      %p144 = scmp.ne.s32.totalorder %s129, %s143
      %p145 = scmp.eq.s32.totalorder %s22, 0
      %p146 = por %p144, %p145
      %s148 = sadd.s32 %s147, 1
      %p151 = scmp.eq.s32.totalorder %s16, 3
      %p152 = scmp.ne.s32.totalorder %s147, %s149
      %p153 = scmp.eq.s32.totalorder %s16, 0
      %p154 = por %p152, %p153
      %p155 = scmp.ne.s32.totalorder %s147, %s149
      %p156 = scmp.eq.s32.totalorder %s21, 3
      %p157 = por %p155, %p156
      %p158 = scmp.ne.s32.totalorder %s149, %s150
      %p159 = scmp.eq.s32.totalorder %s21, 0
      %p160 = por %p158, %p159
      %p161 = scmp.ne.s32.totalorder %s149, %s150
      %p162 = scmp.eq.s32.totalorder %s22, 3
      %p163 = por %p161, %p162
      %p165 = scmp.ne.s32.totalorder %s150, %s164
      %p166 = scmp.eq.s32.totalorder %s22, 0
      %p167 = por %p165, %p166
      %s169 = sadd.s32 %s168, 1
      %p172 = scmp.eq.s32.totalorder %s16, 3
      %p173 = scmp.ne.s32.totalorder %s168, %s170
      %p174 = scmp.eq.s32.totalorder %s16, 0
      %p175 = por %p173, %p174
      %p176 = scmp.ne.s32.totalorder %s168, %s170
      %p177 = scmp.eq.s32.totalorder %s21, 3
      %p178 = por %p176, %p177
      %p179 = scmp.ne.s32.totalorder %s170, %s171
      %p180 = scmp.eq.s32.totalorder %s21, 0
      %p181 = por %p179, %p180
      %p182 = scmp.ne.s32.totalorder %s170, %s171
      %p183 = scmp.eq.s32.totalorder %s22, 3
      %p184 = por %p182, %p183
      %p186 = scmp.ne.s32.totalorder %s171, %s185
      %p187 = scmp.eq.s32.totalorder %s22, 0
      %p188 = por %p186, %p187
      %s190 = sadd.s32 %s189, 1
      %p193 = scmp.eq.s32.totalorder %s16, 3
      %p194 = scmp.ne.s32.totalorder %s189, %s191
      %p195 = scmp.eq.s32.totalorder %s16, 0
      %p196 = por %p194, %p195
      %p197 = scmp.ne.s32.totalorder %s189, %s191
      %p198 = scmp.eq.s32.totalorder %s21, 3
      %p199 = por %p197, %p198
      %p200 = scmp.ne.s32.totalorder %s191, %s192
      %p201 = scmp.eq.s32.totalorder %s21, 0
      %p202 = por %p200, %p201
      %p203 = scmp.ne.s32.totalorder %s191, %s192
      %p204 = scmp.eq.s32.totalorder %s22, 3
      %p205 = por %p203, %p204
      %p207 = scmp.ne.s32.totalorder %s192, %s206
      %p208 = scmp.eq.s32.totalorder %s22, 0
      %p209 = por %p207, %p208
      %s210 = ssub.s32 %s23, %s35
      %p211 = scmp.eq.s32.totalorder %s210, 0
      %s213 = sadd.s32 %s212, 1
      %s214 = scalar_select %p211, %s212, %s213
      %p217 = pneg %p211
      %p218 = scmp.eq.s32.totalorder %s16, 3
      %p219 = por %p217, %p218
      %p220 = scmp.ne.s32.totalorder %s212, %s215
      %p221 = scmp.eq.s32.totalorder %s16, 0
      %p222 = por %p220, %p221
      %p223 = scmp.ne.s32.totalorder %s212, %s215
      %p224 = scmp.eq.s32.totalorder %s21, 3
      %p225 = por %p223, %p224
      %p226 = scmp.ne.s32.totalorder %s215, %s216
      %p227 = scmp.eq.s32.totalorder %s21, 0
      %p228 = por %p226, %p227
      %p229 = scmp.ne.s32.totalorder %s215, %s216
      %p230 = scmp.eq.s32.totalorder %s22, 3
      %p231 = por %p229, %p230
      %p233 = scmp.ne.s32.totalorder %s216, %s232
      %p234 = scmp.eq.s32.totalorder %s22, 0
      %p235 = por %p233, %p234
      %p236 = scmp.le.s32.totalorder 1, %s16
      %p237 = scmp.lt.s32.totalorder %s16, 5
      %p238 = pnand %p236, %p237
      %p239 = pneg %p238
      // Predicated region
      $region9: #{tpu_custom_call.1} parent=5 // pred_check
        _
      $region10: #{tpu_custom_call.1} parent=5 // pred_check_branch
        %241 = sbr.rel (%p238) target = $region12
      $region11: #{tpu_custom_call.1} parent=5 // pred_region
        %s242 = ssub.s32 %s16, 1
        // Predicated region
        $region13: #{tpu_custom_call.1} parent=11 // pred_check
          %p243 = pneg %p139
        $region14: #{tpu_custom_call.1} parent=11 // pred_check_branch
          %245 = sbr.rel (%p243) target = $region16
        $region15: #{tpu_custom_call.1} parent=11 // pred_region
          _
        $region16: #{tpu_custom_call.1} parent=11 // pred_fallthru
          _
        // Predicated region
        $region17: #{tpu_custom_call.1} parent=11 // pred_check
          %p246 = pneg %p160
        $region18: #{tpu_custom_call.1} parent=11 // pred_check_branch
          %248 = sbr.rel (%p246) target = $region20
        $region19: #{tpu_custom_call.1} parent=11 // pred_region
          _
        $region20: #{tpu_custom_call.1} parent=11 // pred_fallthru
          _
        // Predicated region
        $region21: #{tpu_custom_call.1} parent=11 // pred_check
          %p249 = pneg %p181
        $region22: #{tpu_custom_call.1} parent=11 // pred_check_branch
          %251 = sbr.rel (%p249) target = $region24
        $region23: #{tpu_custom_call.1} parent=11 // pred_region
          _
        $region24: #{tpu_custom_call.1} parent=11 // pred_fallthru
          _
        // Predicated region
        $region25: #{tpu_custom_call.1} parent=11 // pred_check
          %p252 = pneg %p202
        $region26: #{tpu_custom_call.1} parent=11 // pred_check_branch
          %254 = sbr.rel (%p252) target = $region28
        $region27: #{tpu_custom_call.1} parent=11 // pred_region
          _
        $region28: #{tpu_custom_call.1} parent=11 // pred_fallthru
          _
      $region12: #{tpu_custom_call.1} parent=5 // pred_fallthru
        _
      %p255 = scmp.lt.s32.totalorder %s16, 4
      // Predicated region
      $region29: #{tpu_custom_call.1} parent=5 // pred_check
        %p256 = pneg %p255
      $region30: #{tpu_custom_call.1} parent=5 // pred_check_branch
        %258 = sbr.rel (%p256) target = $region32
      $region31: #{tpu_custom_call.1} parent=5 // pred_region
        // Predicated region
        $region33: #{tpu_custom_call.1} parent=31 // pred_check
          %p259 = pneg %p52
        $region34: #{tpu_custom_call.1} parent=31 // pred_check_branch
          %261 = sbr.rel (%p259) target = $region36
        $region35: #{tpu_custom_call.1} parent=31 // pred_region
          %s262 = smul.u32 %s23, 2
          %s263 = sadd.s32 %s262, %s24
          %p264 = scmp.lt.s32.totalorder %s263, 3
          %s265 = scalar_select %p264, %s263, 3
          %s266 = scalar_lea.vmem %s0, %s265
          %s267 = smul.u32 %s23, 2
          %s268 = sadd.s32 %s267, %s24
        $region36: #{tpu_custom_call.1} parent=31 // pred_fallthru
          _
        // Predicated region
        $region37: #{tpu_custom_call.1} parent=31 // pred_check
          %p269 = pneg %p82
        $region38: #{tpu_custom_call.1} parent=31 // pred_check_branch
          %271 = sbr.rel (%p269) target = $region40
        $region39: #{tpu_custom_call.1} parent=31 // pred_region
          %s272 = smul.u32 %s23, 2
          %s273 = sadd.s32 %s272, %s24
          %s274 = smul.u32 16, %s273
          %p275 = scmp.lt.s32.totalorder %s274, 63
          %s276 = scalar_select %p275, %s274, 63
          %s277 = smul.addr %s276, 8
          %s278 = scalar_lea.vmem %s1, %s277
          %s279 = smul.u32 %s23, 2
          %s280 = sadd.s32 %s279, %s24
          %s281 = smul.u32 16, %s280
        $region40: #{tpu_custom_call.1} parent=31 // pred_fallthru
          _
        // Predicated region
        $region41: #{tpu_custom_call.1} parent=31 // pred_check
          %p282 = pneg %p112
        $region42: #{tpu_custom_call.1} parent=31 // pred_check_branch
          %284 = sbr.rel (%p282) target = $region44
        $region43: #{tpu_custom_call.1} parent=31 // pred_region
          %s285 = smul.u32 %s23, 2
          %s286 = sadd.s32 %s285, %s24
          %s287 = smul.u32 16, %s286
          %p288 = scmp.lt.s32.totalorder %s287, 63
          %s289 = scalar_select %p288, %s287, 63
          %s290 = smul.addr %s289, 8
          %s291 = scalar_lea.vmem %s2, %s290
          %s292 = smul.u32 %s23, 2
          %s293 = sadd.s32 %s292, %s24
          %s294 = smul.u32 16, %s293
        $region44: #{tpu_custom_call.1} parent=31 // pred_fallthru
          _
      $region32: #{tpu_custom_call.1} parent=5 // pred_fallthru
        _
      %p295 = scmp.le.s32.totalorder 1, %s16
      %p296 = scmp.lt.s32.totalorder %s16, 5
      %p297 = pnand %p295, %p296
      %p298 = pneg %p297
      // Predicated region
      $region45: #{tpu_custom_call.1} parent=5 // pred_check
        _
      $region46: #{tpu_custom_call.1} parent=5 // pred_check_branch
        %300 = sbr.rel (%p297) target = $region48
      $region47: #{tpu_custom_call.1} parent=5 // pred_region
        %s301 = ssub.s32 %s16, 1
        %s302 = smul.u32 %s25, 2
        %s303 = sadd.s32 %s302, %s26
        %p304 = scmp.lt.s32.totalorder %s303, 3
        %s305 = scalar_select %p304, %s303, 3
        %s306 = scalar_lea.vmem %s0, %s305
        %p307 = pneg %p58
        %p308 = pneg %p55
        %s309 = smul.u32 %s25, 2
        %s310 = sadd.s32 %s309, %s26
        %s311 = smul.u32 16, %s310
        %p312 = scmp.lt.s32.totalorder %s311, 63
        %s313 = scalar_select %p312, %s311, 63
        %s314 = smul.addr %s313, 8
        %s315 = scalar_lea.vmem %s1, %s314
        %p316 = pneg %p88
        %p317 = pneg %p85
        %s318 = smul.u32 %s25, 2
        %s319 = sadd.s32 %s318, %s26
        %s320 = smul.u32 16, %s319
        %p321 = scmp.lt.s32.totalorder %s320, 63
        %s322 = scalar_select %p321, %s320, 63
        %s323 = smul.addr %s322, 8
        %s324 = scalar_lea.vmem %s2, %s323
        %p325 = pneg %p118
        %p326 = pneg %p115
        %p327 = pneg %p139
        %p328 = pneg %p136
        %p329 = pneg %p160
        %p330 = pneg %p157
        %p331 = pneg %p181
        %p332 = pneg %p178
        %p333 = pneg %p202
        %p334 = pneg %p199
        %p335 = pneg %p228
        %p336 = pneg %p225
        %s337 = sand.u32 %s215, 1
        %s338 = scalar_lea.sflag [#allocation3], %s337
        %s339 = sand.u32 %s215, 1
        %s340 = smul.addr %s339, 16
        %s341 = scalar_lea.vmem [#allocation2], %s340
        %s342 = smul.u32 %s25, 2
        %s343 = sadd.s32 %s342, %s26
        %p344 = scmp.lt.s32.totalorder %s343, 3
        %s345 = scalar_select %p344, %s343, 3
        %s346 = scalar_lea.vmem %s0, %s345
        %s347 = smul.u32 %s25, 2
        %s348 = sadd.s32 %s347, %s26
        %s349 = smul.u32 %s25, 2
        %s350 = sadd.s32 %s349, %s26
        %s351 = smul.u32 16, %s350
        %p352 = scmp.lt.s32.totalorder %s351, 63
        %s353 = scalar_select %p352, %s351, 63
        %s354 = smul.addr %s353, 8
        %s355 = scalar_lea.vmem %s1, %s354
        %s356 = smul.u32 %s25, 2
        %s357 = sadd.s32 %s356, %s26
        %s358 = smul.u32 16, %s357
        %s359 = smul.u32 %s25, 2
        %s360 = sadd.s32 %s359, %s26
        %s361 = smul.u32 16, %s360
        %p362 = scmp.lt.s32.totalorder %s361, 63
        %s363 = scalar_select %p362, %s361, 63
        %s364 = smul.addr %s363, 8
        %s365 = scalar_lea.vmem %s2, %s364
        %s366 = smul.u32 %s25, 2
        %s367 = sadd.s32 %s366, %s26
        %s368 = smul.u32 16, %s367
        %p369 = scmp.eq.s32.totalorder %s26, 0
        // Predicated region
        $region49: #{tpu_custom_call.1} parent=47 // pred_check
          %p370 = pneg %p369
        $region50: #{tpu_custom_call.1} parent=47 // pred_check_branch
          %372 = sbr.rel (%p370) target = $region52
        $region51: #{tpu_custom_call.1} parent=47 // pred_region
          %vm373 = vcmask 261120
          %374 = vst.msk [vmem:[%s341] sm:$0xff] %vm373, 0.0
          %375 = vst.msk [vmem:[%s341 + $0x8] sm:$0xff] %vm373, 0.0
        $region52: #{tpu_custom_call.1} parent=47 // pred_fallthru
          _
        %v376 = vld [vmem:[%s355] sm:$0xff]
        %v377 = vld [vmem:[%s355 + $0x8] sm:$0xff]
        %v378 = vld [vmem:[%s355 + $0x10] sm:$0xff]
        %v379 = vld [vmem:[%s355 + $0x18] sm:$0xff]
        %v380 = vld [vmem:[%s355 + $0x20] sm:$0xff]
        %v381 = vld [vmem:[%s355 + $0x28] sm:$0xff]
        %v382 = vld [vmem:[%s355 + $0x30] sm:$0xff]
        %v383 = vld [vmem:[%s355 + $0x38] sm:$0xff]
        %v384 = vld [vmem:[%s355 + $0x40] sm:$0xff]
        %v385 = vld [vmem:[%s355 + $0x48] sm:$0xff]
        %v386 = vld [vmem:[%s355 + $0x50] sm:$0xff]
        %v387 = vld [vmem:[%s355 + $0x58] sm:$0xff]
        %v388 = vld [vmem:[%s355 + $0x60] sm:$0xff]
        %v389 = vld [vmem:[%s355 + $0x68] sm:$0xff]
        %v390 = vld [vmem:[%s355 + $0x70] sm:$0xff]
        %v391 = vld [vmem:[%s355 + $0x78] sm:$0xff]
        %v392 = vld [vmem:[%s3] sm:$0xff]
        %v393 = vld [vmem:[%s3 + $0x8] sm:$0xff]
        %v394 = vld [vmem:[%s4] sm:$0x1]
        %v396 = vlaneseq
        %v397 = vshrl.u32 %v396, 7
        %v398 = vsub.s32 0, %v397
        %v399 = vrot.slane %v394, %v398
        %vm401 = vcmask 130048
        %v403 = vsel %vm401, %v376, 0
        %v406 = vsel %vm401, %v377, 0
        %v409 = vsel %vm401, %v378, 0
        %v412 = vsel %vm401, %v379, 0
        %v415 = vsel %vm401, %v380, 0
        %v418 = vsel %vm401, %v381, 0
        %v421 = vsel %vm401, %v382, 0
        %v424 = vsel %vm401, %v383, 0
        %v427 = vsel %vm401, %v384, 0
        %v430 = vsel %vm401, %v385, 0
        %v433 = vsel %vm401, %v386, 0
        %v436 = vsel %vm401, %v387, 0
        %v439 = vsel %vm401, %v388, 0
        %v442 = vsel %vm401, %v389, 0
        %v445 = vsel %vm401, %v390, 0
        %v448 = vsel %vm401, %v391, 0
        %450 = vmatprep.subr.mxu0 0.0
        %451 = vmatpush1.msra.mxu0 %v392
        %452 = vmatprep.subr.mxu0 0.0
        %453 = vmatpush1.msra.mxu0 %v393
        %454 = vmatprep.subr.mxu0 0.0
        %455 = vmatpush1.msra.mxu0 0.0
        %456 = vmatprep.subr.mxu0 0.0
        %457 = vmatpush1.msra.mxu0 0.0
        %458 = vmatprep.subr.mxu0 0.0
        %459 = vmatpush1.msra.mxu0 0.0
        %460 = vmatprep.subr.mxu0 0.0
        %461 = vmatpush1.msra.mxu0 0.0
        %462 = vmatprep.subr.mxu0 0.0
        %463 = vmatpush1.msra.mxu0 0.0
        %464 = vmatprep.subr.mxu0 0.0
        %465 = vmatpush1.msra.mxu0 0.0
        %466 = vmatprep.subr.mxu0 0.0
        %467 = vmatpush1.msra.mxu0 0.0
        %468 = vmatprep.subr.mxu0 0.0
        %469 = vmatpush1.msra.mxu0 0.0
        %470 = vmatprep.subr.mxu0 0.0
        %471 = vmatpush1.msra.mxu0 0.0
        %472 = vmatprep.subr.mxu0 0.0
        %473 = vmatpush1.msra.mxu0 0.0
        %474 = vmatprep.subr.mxu0 0.0
        %475 = vmatpush1.msra.mxu0 0.0
        %476 = vmatprep.subr.mxu0 0.0
        %477 = vmatpush1.msra.mxu0 0.0
        %478 = vmatprep.subr.mxu0 0.0
        %479 = vmatpush1.msra.mxu0 0.0
        %480 = vmatprep.subr.mxu0 0.0
        %481 = vmatpush1.msra.mxu0 0.0
        %482 = vmatprep.subr.mxu0 0.0
        %483 = vmatpush1.msra.mxu0 0.0
        %484 = vmatprep.subr.mxu0 0.0
        %485 = vmatpush1.msra.mxu0 0.0
        %486 = vmatprep.subr.mxu0 0.0
        %487 = vmatpush1.msra.mxu0 0.0
        %488 = vmatprep.subr.mxu0 0.0
        %489 = vmatpush1.msra.mxu0 0.0
        %490 = vmatprep.subr.mxu0 0.0
        %491 = vmatpush1.msra.mxu0 0.0
        %492 = vmatprep.subr.mxu0 0.0
        %493 = vmatpush1.msra.mxu0 0.0
        %494 = vmatprep.subr.mxu0 0.0
        %495 = vmatpush1.msra.mxu0 0.0
        %496 = vmatprep.subr.mxu0 0.0
        %497 = vmatpush1.msra.mxu0 0.0
        %498 = vmatprep.subr.mxu0 0.0
        %499 = vmatpush1.msra.mxu0 0.0
        %500 = vmatprep.subr.mxu0 0.0
        %501 = vmatpush1.msra.mxu0 0.0
        %502 = vmatprep.subr.mxu0 0.0
        %503 = vmatpush1.msra.mxu0 0.0
        %504 = vmatprep.subr.mxu0 0.0
        %505 = vmatpush1.msra.mxu0 0.0
        %506 = vmatprep.subr.mxu0 0.0
        %507 = vmatpush1.msra.mxu0 0.0
        %508 = vmatprep.subr.mxu0 0.0
        %509 = vmatpush1.msra.mxu0 0.0
        %510 = vmatprep.subr.mxu0 0.0
        %511 = vmatpush1.msra.mxu0 0.0
        %512 = vmatprep.subr.mxu0 0.0
        %513 = vmatpush1.msra.mxu0 0.0
        %514 = vmatprep.mubr.f32.mxu0 0.0
        %515 = vmatmul.mubr.f32.gmra.mrb[0].mxu0 %v403
        %v516 = vpop.f32.mrb[0].mxu0
        %v517 = vadd.f32 %v399, %v516
        %v518 = vpop.f32.mrb[0].mxu0
        %519 = vmatprep.mubr.f32.mxu0 0.0
        %520 = vmatmul.mubr.f32.gmra.mrb[0].mxu0 %v406
        %v521 = vpop.f32.mrb[0].mxu0
        %v522 = vadd.f32 %v399, %v521
        %v523 = vpop.f32.mrb[0].mxu0
        %524 = vmatprep.mubr.f32.mxu0 0.0
        %525 = vmatmul.mubr.f32.gmra.mrb[0].mxu0 %v409
        %v526 = vpop.f32.mrb[0].mxu0
        %v527 = vadd.f32 %v399, %v526
        %v528 = vpop.f32.mrb[0].mxu0
        %529 = vmatprep.mubr.f32.mxu0 0.0
        %530 = vmatmul.mubr.f32.gmra.mrb[0].mxu0 %v412
        %v531 = vpop.f32.mrb[0].mxu0
        %v532 = vadd.f32 %v399, %v531
        %v533 = vpop.f32.mrb[0].mxu0
        %534 = vmatprep.mubr.f32.mxu0 0.0
        %535 = vmatmul.mubr.f32.gmra.mrb[0].mxu0 %v415
        %v536 = vpop.f32.mrb[0].mxu0
        %v537 = vadd.f32 %v399, %v536
        %v538 = vpop.f32.mrb[0].mxu0
        %539 = vmatprep.mubr.f32.mxu0 0.0
        %540 = vmatmul.mubr.f32.gmra.mrb[0].mxu0 %v418
        %v541 = vpop.f32.mrb[0].mxu0
        %v542 = vadd.f32 %v399, %v541
        %v543 = vpop.f32.mrb[0].mxu0
        %544 = vmatprep.mubr.f32.mxu0 0.0
        %545 = vmatmul.mubr.f32.gmra.mrb[0].mxu0 %v421
        %v546 = vpop.f32.mrb[0].mxu0
        %v547 = vadd.f32 %v399, %v546
        %v548 = vpop.f32.mrb[0].mxu0
        %549 = vmatprep.mubr.f32.mxu0 0.0
        %550 = vmatmul.mubr.f32.gmra.mrb[0].mxu0 %v424
        %v551 = vpop.f32.mrb[0].mxu0
        %v552 = vadd.f32 %v399, %v551
        %v553 = vpop.f32.mrb[0].mxu0
        %554 = vmatprep.mubr.f32.mxu0 0.0
        %555 = vmatmul.mubr.f32.gmra.mrb[0].mxu0 %v427
        %v556 = vpop.f32.mrb[0].mxu0
        %v557 = vadd.f32 %v399, %v556
        %v558 = vpop.f32.mrb[0].mxu0
        %559 = vmatprep.mubr.f32.mxu0 0.0
        %560 = vmatmul.mubr.f32.gmra.mrb[0].mxu0 %v430
        %v561 = vpop.f32.mrb[0].mxu0
        %v562 = vadd.f32 %v399, %v561
        %v563 = vpop.f32.mrb[0].mxu0
        %564 = vmatprep.mubr.f32.mxu0 0.0
        %565 = vmatmul.mubr.f32.gmra.mrb[0].mxu0 %v433
        %v566 = vpop.f32.mrb[0].mxu0
        %v567 = vadd.f32 %v399, %v566
        %v568 = vpop.f32.mrb[0].mxu0
        %569 = vmatprep.mubr.f32.mxu0 0.0
        %570 = vmatmul.mubr.f32.gmra.mrb[0].mxu0 %v436
        %v571 = vpop.f32.mrb[0].mxu0
        %v572 = vadd.f32 %v399, %v571
        %v573 = vpop.f32.mrb[0].mxu0
        %574 = vmatprep.mubr.f32.mxu0 0.0
        %575 = vmatmul.mubr.f32.gmra.mrb[0].mxu0 %v439
        %v576 = vpop.f32.mrb[0].mxu0
        %v577 = vadd.f32 %v399, %v576
        %v578 = vpop.f32.mrb[0].mxu0
        %579 = vmatprep.mubr.f32.mxu0 0.0
        %580 = vmatmul.mubr.f32.gmra.mrb[0].mxu0 %v442
        %v581 = vpop.f32.mrb[0].mxu0
        %v582 = vadd.f32 %v399, %v581
        %v583 = vpop.f32.mrb[0].mxu0
        %584 = vmatprep.mubr.f32.mxu0 0.0
        %585 = vmatmul.mubr.f32.gmra.mrb[0].mxu0 %v445
        %v586 = vpop.f32.mrb[0].mxu0
        %v587 = vadd.f32 %v399, %v586
        %v588 = vpop.f32.mrb[0].mxu0
        %589 = vmatprep.mubr.f32.mxu0 0.0
        %590 = vmatmul.mubr.f32.gmra.mrb[0].mxu0 %v448
        %v591 = vpop.f32.mrb[0].mxu0
        %v592 = vadd.f32 %v399, %v591
        %v593 = vpop.f32.mrb[0].mxu0
        %594 = vdwg.mxu0
        %v595 = vmax.f32 %v517, 0.0
        %v596 = vmax.f32 %v522, 0.0
        %v597 = vmax.f32 %v527, 0.0
        %v598 = vmax.f32 %v532, 0.0
        %v599 = vmax.f32 %v537, 0.0
        %v600 = vmax.f32 %v542, 0.0
        %v601 = vmax.f32 %v547, 0.0
        %v602 = vmax.f32 %v552, 0.0
        %v603 = vmax.f32 %v557, 0.0
        %v604 = vmax.f32 %v562, 0.0
        %v605 = vmax.f32 %v567, 0.0
        %v606 = vmax.f32 %v572, 0.0
        %v607 = vmax.f32 %v577, 0.0
        %v608 = vmax.f32 %v582, 0.0
        %v609 = vmax.f32 %v587, 0.0
        %v610 = vmax.f32 %v592, 0.0
        %v611 = vand.u32 2147483647, %v517
        %v612 = vand.u32 2147483647, %v522
        %v613 = vand.u32 2147483647, %v527
        %v614 = vand.u32 2147483647, %v532
        %v615 = vand.u32 2147483647, %v537
        %v616 = vand.u32 2147483647, %v542
        %v617 = vand.u32 2147483647, %v547
        %v618 = vand.u32 2147483647, %v552
        %v619 = vand.u32 2147483647, %v557
        %v620 = vand.u32 2147483647, %v562
        %v621 = vand.u32 2147483647, %v567
        %v622 = vand.u32 2147483647, %v572
        %v623 = vand.u32 2147483647, %v577
        %v624 = vand.u32 2147483647, %v582
        %v625 = vand.u32 2147483647, %v587
        %v626 = vand.u32 2147483647, %v592
        %v627 = vsub.f32 0.0, %v611
        %v628 = vsub.f32 0.0, %v612
        %v629 = vsub.f32 0.0, %v613
        %v630 = vsub.f32 0.0, %v614
        %v631 = vsub.f32 0.0, %v615
        %v632 = vsub.f32 0.0, %v616
        %v633 = vsub.f32 0.0, %v617
        %v634 = vsub.f32 0.0, %v618
        %v635 = vsub.f32 0.0, %v619
        %v636 = vsub.f32 0.0, %v620
        %v637 = vsub.f32 0.0, %v621
        %v638 = vsub.f32 0.0, %v622
        %v639 = vsub.f32 0.0, %v623
        %v640 = vsub.f32 0.0, %v624
        %v641 = vsub.f32 0.0, %v625
        %v642 = vsub.f32 0.0, %v626
        %v643 = vmul.f32 %v627, 1.442695
        %v644 = vpow.pop %v643
        %v645 = vmul.f32 %v628, 1.442695
        %v646 = vpow.pop %v645
        %v647 = vmul.f32 %v629, 1.442695
        %v648 = vpow.pop %v647
        %v649 = vmul.f32 %v630, 1.442695
        %v650 = vpow.pop %v649
        %v651 = vmul.f32 %v631, 1.442695
        %v652 = vpow.pop %v651
        %v653 = vmul.f32 %v632, 1.442695
        %v654 = vpow.pop %v653
        %v655 = vmul.f32 %v633, 1.442695
        %v656 = vpow.pop %v655
        %v657 = vmul.f32 %v634, 1.442695
        %v658 = vpow.pop %v657
        %v659 = vmul.f32 %v635, 1.442695
        %v660 = vpow.pop %v659
        %v661 = vmul.f32 %v636, 1.442695
        %v662 = vpow.pop %v661
        %v663 = vmul.f32 %v637, 1.442695
        %v664 = vpow.pop %v663
        %v665 = vmul.f32 %v638, 1.442695
        %v666 = vpow.pop %v665
        %v667 = vmul.f32 %v639, 1.442695
        %v668 = vpow.pop %v667
        %v669 = vmul.f32 %v640, 1.442695
        %v670 = vpow.pop %v669
        %v671 = vmul.f32 %v641, 1.442695
        %v672 = vpow.pop %v671
        %v673 = vmul.f32 %v642, 1.442695
        %v674 = vpow.pop %v673
        %v675 = vadd.f32 %v644, 1.0
        %v676 = vadd.f32 %v646, 1.0
        %v677 = vadd.f32 %v648, 1.0
        %v678 = vadd.f32 %v650, 1.0
        %v679 = vadd.f32 %v652, 1.0
        %v680 = vadd.f32 %v654, 1.0
        %v681 = vadd.f32 %v656, 1.0
        %v682 = vadd.f32 %v658, 1.0
        %v683 = vadd.f32 %v660, 1.0
        %v684 = vadd.f32 %v662, 1.0
        %v685 = vadd.f32 %v664, 1.0
        %v686 = vadd.f32 %v666, 1.0
        %v687 = vadd.f32 %v668, 1.0
        %v688 = vadd.f32 %v670, 1.0
        %v689 = vadd.f32 %v672, 1.0
        %v690 = vadd.f32 %v674, 1.0
        %v691 = vlog2.pop %v675
        %v692 = vmul.f32 %v691, 0.6931472
        %v693 = vlog2.pop %v676
        %v694 = vmul.f32 %v693, 0.6931472
        %v695 = vlog2.pop %v677
        %v696 = vmul.f32 %v695, 0.6931472
        %v697 = vlog2.pop %v678
        %v698 = vmul.f32 %v697, 0.6931472
        %v699 = vlog2.pop %v679
        %v700 = vmul.f32 %v699, 0.6931472
        %v701 = vlog2.pop %v680
        %v702 = vmul.f32 %v701, 0.6931472
        %v703 = vlog2.pop %v681
        %v704 = vmul.f32 %v703, 0.6931472
        %v705 = vlog2.pop %v682
        %v706 = vmul.f32 %v705, 0.6931472
        %v707 = vlog2.pop %v683
        %v708 = vmul.f32 %v707, 0.6931472
        %v709 = vlog2.pop %v684
        %v710 = vmul.f32 %v709, 0.6931472
        %v711 = vlog2.pop %v685
        %v712 = vmul.f32 %v711, 0.6931472
        %v713 = vlog2.pop %v686
        %v714 = vmul.f32 %v713, 0.6931472
        %v715 = vlog2.pop %v687
        %v716 = vmul.f32 %v715, 0.6931472
        %v717 = vlog2.pop %v688
        %v718 = vmul.f32 %v717, 0.6931472
        %v719 = vlog2.pop %v689
        %v720 = vmul.f32 %v719, 0.6931472
        %v721 = vlog2.pop %v690
        %v722 = vmul.f32 %v721, 0.6931472
        %v723 = vadd.f32 %v595, %v692
        %v724 = vadd.f32 %v596, %v694
        %v725 = vadd.f32 %v597, %v696
        %v726 = vadd.f32 %v598, %v698
        %v727 = vadd.f32 %v599, %v700
        %v728 = vadd.f32 %v600, %v702
        %v729 = vadd.f32 %v601, %v704
        %v730 = vadd.f32 %v602, %v706
        %v731 = vadd.f32 %v603, %v708
        %v732 = vadd.f32 %v604, %v710
        %v733 = vadd.f32 %v605, %v712
        %v734 = vadd.f32 %v606, %v714
        %v735 = vadd.f32 %v607, %v716
        %v736 = vadd.f32 %v608, %v718
        %v737 = vadd.f32 %v609, %v720
        %v738 = vadd.f32 %v610, %v722
        %v739 = vsub.f32 %v723, 0.6931472
        %v740 = vsub.f32 %v724, 0.6931472
        %v741 = vsub.f32 %v725, 0.6931472
        %v742 = vsub.f32 %v726, 0.6931472
        %v743 = vsub.f32 %v727, 0.6931472
        %v744 = vsub.f32 %v728, 0.6931472
        %v745 = vsub.f32 %v729, 0.6931472
        %v746 = vsub.f32 %v730, 0.6931472
        %v747 = vsub.f32 %v731, 0.6931472
        %v748 = vsub.f32 %v732, 0.6931472
        %v749 = vsub.f32 %v733, 0.6931472
        %v750 = vsub.f32 %v734, 0.6931472
        %v751 = vsub.f32 %v735, 0.6931472
        %v752 = vsub.f32 %v736, 0.6931472
        %v753 = vsub.f32 %v737, 0.6931472
        %v754 = vsub.f32 %v738, 0.6931472
        %v755 = vld [vmem:[%s5] sm:$0xff]
        %v756 = vld [vmem:[%s5 + $0x8] sm:$0xff]
        %v757 = vld [vmem:[%s5 + $0x10] sm:$0xff]
        %v758 = vld [vmem:[%s5 + $0x18] sm:$0xff]
        %v759 = vld [vmem:[%s6] sm:$0x1]
        %v761 = vlaneseq
        %v762 = vshrl.u32 %v761, 7
        %v763 = vsub.s32 0, %v762
        %v764 = vrot.slane %v759, %v763
        %vm766 = vcmask 261120
        %v768 = vsel %vm766, %v739, 0
        %v771 = vsel %vm766, %v740, 0
        %v774 = vsel %vm766, %v741, 0
        %v777 = vsel %vm766, %v742, 0
        %v780 = vsel %vm766, %v743, 0
        %v783 = vsel %vm766, %v744, 0
        %v786 = vsel %vm766, %v745, 0
        %v789 = vsel %vm766, %v746, 0
        %v792 = vsel %vm766, %v747, 0
        %v795 = vsel %vm766, %v748, 0
        %v798 = vsel %vm766, %v749, 0
        %v801 = vsel %vm766, %v750, 0
        %v804 = vsel %vm766, %v751, 0
        %v807 = vsel %vm766, %v752, 0
        %v810 = vsel %vm766, %v753, 0
        %v813 = vsel %vm766, %v754, 0
        %815 = vmatprep.subr.mxu0 0.0
        %816 = vmatpush1.msra.mxu0 %v755
        %817 = vmatprep.subr.mxu0 0.0
        %818 = vmatpush1.msra.mxu0 %v756
        %819 = vmatprep.subr.mxu0 0.0
        %820 = vmatpush1.msra.mxu0 %v757
        %821 = vmatprep.subr.mxu0 0.0
        %822 = vmatpush1.msra.mxu0 %v758
        %823 = vmatprep.subr.mxu0 0.0
        %824 = vmatpush1.msra.mxu0 0.0
        %825 = vmatprep.subr.mxu0 0.0
        %826 = vmatpush1.msra.mxu0 0.0
        %827 = vmatprep.subr.mxu0 0.0
        %828 = vmatpush1.msra.mxu0 0.0
        %829 = vmatprep.subr.mxu0 0.0
        %830 = vmatpush1.msra.mxu0 0.0
        %831 = vmatprep.subr.mxu0 0.0
        %832 = vmatpush1.msra.mxu0 0.0
        %833 = vmatprep.subr.mxu0 0.0
        %834 = vmatpush1.msra.mxu0 0.0
        %835 = vmatprep.subr.mxu0 0.0
        %836 = vmatpush1.msra.mxu0 0.0
        %837 = vmatprep.subr.mxu0 0.0
        %838 = vmatpush1.msra.mxu0 0.0
        %839 = vmatprep.subr.mxu0 0.0
        %840 = vmatpush1.msra.mxu0 0.0
        %841 = vmatprep.subr.mxu0 0.0
        %842 = vmatpush1.msra.mxu0 0.0
        %843 = vmatprep.subr.mxu0 0.0
        %844 = vmatpush1.msra.mxu0 0.0
        %845 = vmatprep.subr.mxu0 0.0
        %846 = vmatpush1.msra.mxu0 0.0
        %847 = vmatprep.subr.mxu0 0.0
        %848 = vmatpush1.msra.mxu0 0.0
        %849 = vmatprep.subr.mxu0 0.0
        %850 = vmatpush1.msra.mxu0 0.0
        %851 = vmatprep.subr.mxu0 0.0
        %852 = vmatpush1.msra.mxu0 0.0
        %853 = vmatprep.subr.mxu0 0.0
        %854 = vmatpush1.msra.mxu0 0.0
        %855 = vmatprep.subr.mxu0 0.0
        %856 = vmatpush1.msra.mxu0 0.0
        %857 = vmatprep.subr.mxu0 0.0
        %858 = vmatpush1.msra.mxu0 0.0
        %859 = vmatprep.subr.mxu0 0.0
        %860 = vmatpush1.msra.mxu0 0.0
        %861 = vmatprep.subr.mxu0 0.0
        %862 = vmatpush1.msra.mxu0 0.0
        %863 = vmatprep.subr.mxu0 0.0
        %864 = vmatpush1.msra.mxu0 0.0
        %865 = vmatprep.subr.mxu0 0.0
        %866 = vmatpush1.msra.mxu0 0.0
        %867 = vmatprep.subr.mxu0 0.0
        %868 = vmatpush1.msra.mxu0 0.0
        %869 = vmatprep.subr.mxu0 0.0
        %870 = vmatpush1.msra.mxu0 0.0
        %871 = vmatprep.subr.mxu0 0.0
        %872 = vmatpush1.msra.mxu0 0.0
        %873 = vmatprep.subr.mxu0 0.0
        %874 = vmatpush1.msra.mxu0 0.0
        %875 = vmatprep.subr.mxu0 0.0
        %876 = vmatpush1.msra.mxu0 0.0
        %877 = vmatprep.subr.mxu0 0.0
        %878 = vmatpush1.msra.mxu0 0.0
        %879 = vmatprep.mubr.f32.mxu0 0.0
        %880 = vmatmul.mubr.f32.gmra.mrb[0].mxu0 %v768
        %v881 = vpop.f32.mrb[0].mxu0
        %v882 = vadd.f32 %v764, %v881
        %v883 = vpop.f32.mrb[0].mxu0
        %884 = vmatprep.mubr.f32.mxu0 0.0
        %885 = vmatmul.mubr.f32.gmra.mrb[0].mxu0 %v771
        %v886 = vpop.f32.mrb[0].mxu0
        %v887 = vadd.f32 %v764, %v886
        %v888 = vpop.f32.mrb[0].mxu0
        %889 = vmatprep.mubr.f32.mxu0 0.0
        %890 = vmatmul.mubr.f32.gmra.mrb[0].mxu0 %v774
        %v891 = vpop.f32.mrb[0].mxu0
        %v892 = vadd.f32 %v764, %v891
        %v893 = vpop.f32.mrb[0].mxu0
        %894 = vmatprep.mubr.f32.mxu0 0.0
        %895 = vmatmul.mubr.f32.gmra.mrb[0].mxu0 %v777
        %v896 = vpop.f32.mrb[0].mxu0
        %v897 = vadd.f32 %v764, %v896
        %v898 = vpop.f32.mrb[0].mxu0
        %899 = vmatprep.mubr.f32.mxu0 0.0
        %900 = vmatmul.mubr.f32.gmra.mrb[0].mxu0 %v780
        %v901 = vpop.f32.mrb[0].mxu0
        %v902 = vadd.f32 %v764, %v901
        %v903 = vpop.f32.mrb[0].mxu0
        %904 = vmatprep.mubr.f32.mxu0 0.0
        %905 = vmatmul.mubr.f32.gmra.mrb[0].mxu0 %v783
        %v906 = vpop.f32.mrb[0].mxu0
        %v907 = vadd.f32 %v764, %v906
        %v908 = vpop.f32.mrb[0].mxu0
        %909 = vmatprep.mubr.f32.mxu0 0.0
        %910 = vmatmul.mubr.f32.gmra.mrb[0].mxu0 %v786
        %v911 = vpop.f32.mrb[0].mxu0
        %v912 = vadd.f32 %v764, %v911
        %v913 = vpop.f32.mrb[0].mxu0
        %914 = vmatprep.mubr.f32.mxu0 0.0
        %915 = vmatmul.mubr.f32.gmra.mrb[0].mxu0 %v789
        %v916 = vpop.f32.mrb[0].mxu0
        %v917 = vadd.f32 %v764, %v916
        %v918 = vpop.f32.mrb[0].mxu0
        %919 = vmatprep.mubr.f32.mxu0 0.0
        %920 = vmatmul.mubr.f32.gmra.mrb[0].mxu0 %v792
        %v921 = vpop.f32.mrb[0].mxu0
        %v922 = vadd.f32 %v764, %v921
        %v923 = vpop.f32.mrb[0].mxu0
        %924 = vmatprep.mubr.f32.mxu0 0.0
        %925 = vmatmul.mubr.f32.gmra.mrb[0].mxu0 %v795
        %v926 = vpop.f32.mrb[0].mxu0
        %v927 = vadd.f32 %v764, %v926
        %v928 = vpop.f32.mrb[0].mxu0
        %929 = vmatprep.mubr.f32.mxu0 0.0
        %930 = vmatmul.mubr.f32.gmra.mrb[0].mxu0 %v798
        %v931 = vpop.f32.mrb[0].mxu0
        %v932 = vadd.f32 %v764, %v931
        %v933 = vpop.f32.mrb[0].mxu0
        %934 = vmatprep.mubr.f32.mxu0 0.0
        %935 = vmatmul.mubr.f32.gmra.mrb[0].mxu0 %v801
        %v936 = vpop.f32.mrb[0].mxu0
        %v937 = vadd.f32 %v764, %v936
        %v938 = vpop.f32.mrb[0].mxu0
        %939 = vmatprep.mubr.f32.mxu0 0.0
        %940 = vmatmul.mubr.f32.gmra.mrb[0].mxu0 %v804
        %v941 = vpop.f32.mrb[0].mxu0
        %v942 = vadd.f32 %v764, %v941
        %v943 = vpop.f32.mrb[0].mxu0
        %944 = vmatprep.mubr.f32.mxu0 0.0
        %945 = vmatmul.mubr.f32.gmra.mrb[0].mxu0 %v807
        %v946 = vpop.f32.mrb[0].mxu0
        %v947 = vadd.f32 %v764, %v946
        %v948 = vpop.f32.mrb[0].mxu0
        %949 = vmatprep.mubr.f32.mxu0 0.0
        %950 = vmatmul.mubr.f32.gmra.mrb[0].mxu0 %v810
        %v951 = vpop.f32.mrb[0].mxu0
        %v952 = vadd.f32 %v764, %v951
        %v953 = vpop.f32.mrb[0].mxu0
        %954 = vmatprep.mubr.f32.mxu0 0.0
        %955 = vmatmul.mubr.f32.gmra.mrb[0].mxu0 %v813
        %v956 = vpop.f32.mrb[0].mxu0
        %v957 = vadd.f32 %v764, %v956
        %v958 = vpop.f32.mrb[0].mxu0
        %959 = vdwg.mxu0
        %v960 = vld [vmem:[%s365] sm:$0xff]
        %v961 = vld [vmem:[%s365 + $0x8] sm:$0xff]
        %v962 = vld [vmem:[%s365 + $0x10] sm:$0xff]
        %v963 = vld [vmem:[%s365 + $0x18] sm:$0xff]
        %v964 = vld [vmem:[%s365 + $0x20] sm:$0xff]
        %v965 = vld [vmem:[%s365 + $0x28] sm:$0xff]
        %v966 = vld [vmem:[%s365 + $0x30] sm:$0xff]
        %v967 = vld [vmem:[%s365 + $0x38] sm:$0xff]
        %v968 = vld [vmem:[%s365 + $0x40] sm:$0xff]
        %v969 = vld [vmem:[%s365 + $0x48] sm:$0xff]
        %v970 = vld [vmem:[%s365 + $0x50] sm:$0xff]
        %v971 = vld [vmem:[%s365 + $0x58] sm:$0xff]
        %v972 = vld [vmem:[%s365 + $0x60] sm:$0xff]
        %v973 = vld [vmem:[%s365 + $0x68] sm:$0xff]
        %v974 = vld [vmem:[%s365 + $0x70] sm:$0xff]
        %v975 = vld [vmem:[%s365 + $0x78] sm:$0xff]
        %v976 = vmul.f32 %v960, %v882
        %v977 = vmul.f32 %v961, %v887
        %v978 = vmul.f32 %v962, %v892
        %v979 = vmul.f32 %v963, %v897
        %v980 = vmul.f32 %v964, %v902
        %v981 = vmul.f32 %v965, %v907
        %v982 = vmul.f32 %v966, %v912
        %v983 = vmul.f32 %v967, %v917
        %v984 = vmul.f32 %v968, %v922
        %v985 = vmul.f32 %v969, %v927
        %v986 = vmul.f32 %v970, %v932
        %v987 = vmul.f32 %v971, %v937
        %v988 = vmul.f32 %v972, %v942
        %v989 = vmul.f32 %v973, %v947
        %v990 = vmul.f32 %v974, %v952
        %v991 = vmul.f32 %v975, %v957
        %v992 = vlaneseq
        %v993 = vshrl.u32 %v992, 7
        %v994 = vadd.s32 %v993, 8
        %v995 = vld [vmem:[%s346] sm:$0x1]
        %v996 = vlaneseq
        %v997 = vshrl.u32 %v996, 7
        %v998 = vsub.s32 0, %v997
        %v999 = vrot.slane %v995, %v998
        %vm1000 = vcmp.eq.s32.totalorder %v993, %v999
        %vm1001 = vcmp.eq.s32.totalorder %v994, %v999
        %v1002 = vsel %vm1000, 1, 0
        %v1003 = vsel %vm1001, 1, 0
        %v1004 = vcvt.s32.f32 %v1002
        %v1005 = vcvt.s32.f32 %v1003
        %v1006 = vld [vmem:[%s341] sm:$0xff]
        %v1007 = vld [vmem:[%s341 + $0x8] sm:$0xff]
        %1008 = vmatprep.subr.mxu0 0.0
        %1009 = vmatpush1.msra.mxu0 %v976
        %1010 = vmatprep.subr.mxu0 0.0
        %1011 = vmatpush1.msra.mxu0 %v977
        %1012 = vmatprep.subr.mxu0 0.0
        %1013 = vmatpush1.msra.mxu0 %v978
        %1014 = vmatprep.subr.mxu0 0.0
        %1015 = vmatpush1.msra.mxu0 %v979
        %1016 = vmatprep.subr.mxu0 0.0
        %1017 = vmatpush1.msra.mxu0 %v980
        %1018 = vmatprep.subr.mxu0 0.0
        %1019 = vmatpush1.msra.mxu0 %v981
        %1020 = vmatprep.subr.mxu0 0.0
        %1021 = vmatpush1.msra.mxu0 %v982
        %1022 = vmatprep.subr.mxu0 0.0
        %1023 = vmatpush1.msra.mxu0 %v983
        %1024 = vmatprep.subr.mxu0 0.0
        %1025 = vmatpush1.msra.mxu0 %v984
        %1026 = vmatprep.subr.mxu0 0.0
        %1027 = vmatpush1.msra.mxu0 %v985
        %1028 = vmatprep.subr.mxu0 0.0
        %1029 = vmatpush1.msra.mxu0 %v986
        %1030 = vmatprep.subr.mxu0 0.0
        %1031 = vmatpush1.msra.mxu0 %v987
        %1032 = vmatprep.subr.mxu0 0.0
        %1033 = vmatpush1.msra.mxu0 %v988
        %1034 = vmatprep.subr.mxu0 0.0
        %1035 = vmatpush1.msra.mxu0 %v989
        %1036 = vmatprep.subr.mxu0 0.0
        %1037 = vmatpush1.msra.mxu0 %v990
        %1038 = vmatprep.subr.mxu0 0.0
        %1039 = vmatpush1.msra.mxu0 %v991
        %1040 = vmatprep.subr.mxu0 0.0
        %1041 = vmatpush1.msra.mxu0 0.0
        %1042 = vmatprep.subr.mxu0 0.0
        %1043 = vmatpush1.msra.mxu0 0.0
        %1044 = vmatprep.subr.mxu0 0.0
        %1045 = vmatpush1.msra.mxu0 0.0
        %1046 = vmatprep.subr.mxu0 0.0
        %1047 = vmatpush1.msra.mxu0 0.0
        %1048 = vmatprep.subr.mxu0 0.0
        %1049 = vmatpush1.msra.mxu0 0.0
        %1050 = vmatprep.subr.mxu0 0.0
        %1051 = vmatpush1.msra.mxu0 0.0
        %1052 = vmatprep.subr.mxu0 0.0
        %1053 = vmatpush1.msra.mxu0 0.0
        %1054 = vmatprep.subr.mxu0 0.0
        %1055 = vmatpush1.msra.mxu0 0.0
        %1056 = vmatprep.subr.mxu0 0.0
        %1057 = vmatpush1.msra.mxu0 0.0
        %1058 = vmatprep.subr.mxu0 0.0
        %1059 = vmatpush1.msra.mxu0 0.0
        %1060 = vmatprep.subr.mxu0 0.0
        %1061 = vmatpush1.msra.mxu0 0.0
        %1062 = vmatprep.subr.mxu0 0.0
        %1063 = vmatpush1.msra.mxu0 0.0
        %1064 = vmatprep.subr.mxu0 0.0
        %1065 = vmatpush1.msra.mxu0 0.0
        %1066 = vmatprep.subr.mxu0 0.0
        %1067 = vmatpush1.msra.mxu0 0.0
        %1068 = vmatprep.subr.mxu0 0.0
        %1069 = vmatpush1.msra.mxu0 0.0
        %1070 = vmatprep.subr.mxu0 0.0
        %1071 = vmatpush1.msra.mxu0 0.0
        %1072 = vmatprep.mubr.f32.mxu0 0.0
        %1073 = vmatmul.mubr.f32.gmra.mrb[0].mxu0 %v1004
        %v1074 = vpop.f32.mrb[0].mxu0
        %v1075 = vadd.f32 0.0, %v1074
        %v1076 = vpop.f32.mrb[0].mxu0
        %1077 = vmatprep.mubr.f32.mxu0 0.0
        %1078 = vmatmul.mubr.f32.gmra.mrb[0].mxu0 %v1005
        %v1079 = vpop.f32.mrb[0].mxu0
        %v1080 = vadd.f32 0.0, %v1079
        %v1081 = vpop.f32.mrb[0].mxu0
        %1082 = vdwg.mxu0
        %v1083 = vadd.f32 %v1006, %v1075
        %v1084 = vadd.f32 %v1007, %v1080
        %1085 = vst.msk [vmem:[%s341] sm:$0xff] %vm766, %v1083
        %1086 = vst.msk [vmem:[%s341 + $0x8] sm:$0xff] %vm766, %v1084
        %s1087 = sand.u32 %s215, 1
        %s1088 = scalar_lea.sflag [#allocation3], %s1087
        %s1089 = sand.u32 %s215, 1
        %s1090 = smul.addr %s1089, 16
        %s1091 = scalar_lea.vmem [#allocation2], %s1090
        // Predicated region
        $region53: #{tpu_custom_call.1} parent=47 // pred_check
          %p1092 = pneg %p225
        $region54: #{tpu_custom_call.1} parent=47 // pred_check_branch
          %1094 = sbr.rel (%p1092) target = $region56
        $region55: #{tpu_custom_call.1} parent=47 // pred_region
          %s1096 = ssub.s32 256, 256
          %1097 = vsyncadd %s1088, %s1096
          %s1098 = smul.addr %s25, 2
          %s1099 = smul.addr %s1098, 128
          %s1100 = scalar_lea.hbm %s7, %s1099
          %s1101 = sshll.u32 %s1091, 4
          %s1102 = int_to_ptr.vmem [resolvable:$true] %s1101
          %1107 = dma.vmem_to_hbm [thread:$0]  %s1102, 256, %s1100, %s1088, 128, 128, 8
        $region56: #{tpu_custom_call.1} parent=47 // pred_fallthru
          _
      $region48: #{tpu_custom_call.1} parent=5 // pred_fallthru
        _
      %p1108 = scmp.le.s32.totalorder 2, %s16
      // Predicated region
      $region57: #{tpu_custom_call.1} parent=5 // pred_check
        %p1109 = pneg %p1108
      $region58: #{tpu_custom_call.1} parent=5 // pred_check_branch
        %1111 = sbr.rel (%p1109) target = $region60
      $region59: #{tpu_custom_call.1} parent=5 // pred_region
        %s1112 = ssub.s32 %s16, 2
        // Predicated region
        $region61: #{tpu_custom_call.1} parent=59 // pred_check
          %p1113 = pneg %p231
        $region62: #{tpu_custom_call.1} parent=59 // pred_check_branch
          %1115 = sbr.rel (%p1113) target = $region64
        $region63: #{tpu_custom_call.1} parent=59 // pred_region
          %s1116 = sand.u32 %s216, 1
          %s1117 = scalar_lea.sflag [#allocation3], %s1116
          %s1118 = sand.u32 %s216, 1
          %s1119 = smul.addr %s1118, 16
          %s1120 = scalar_lea.vmem [#allocation2], %s1119
          %1121 = dma.done %s1117, 256
        $region64: #{tpu_custom_call.1} parent=59 // pred_fallthru
          _
      $region60: #{tpu_custom_call.1} parent=5 // pred_fallthru
        _
    $region6: #{tpu_custom_call.1} parent=1 // loop_footer
      %s20 = sadd.s32 1, %s16
    $region7: #{tpu_custom_call.1} parent=1 // loop_footer_branch
      %15 = sbr.rel target = $region3
    $region8: #{tpu_custom_call.1} parent=1 // loop_exit
      _
    %1122 = vsyncpa [#allocation3], 1
    %s1123 = scalar_lea.sflag [#allocation3], 1
    %1124 = vsyncpa %s1123, 1

// kernel: tpu_custom_call.1
$region0: #{tpu_custom_call.1}
  #allocation0 [shape = 'u32[]', space=smem, size = 0x4, offset = 0x4, fixed_abs, tag = 'smem constant byte address 0x4 - core index']
  #allocation1 [shape = 'u32[144,128]{1,0:T(1,128)}', space=vmem, size = 0x12000, scoped, tag = 'internal scratch']
  %s0 = inlined_call_operand.vmem [shape: s32[1,512], index: 0, kind: input, shape index: {}]
  %s1 = inlined_call_operand.vmem [shape: f32[512,16], index: 1, kind: input, shape index: {}]
  %s2 = inlined_call_operand.vmem [shape: f32[512,32], index: 2, kind: input, shape index: {}]
  %s3 = inlined_call_operand.vmem [shape: f32[16,32], index: 3, kind: input, shape index: {}]
  %s4 = inlined_call_operand.vmem [shape: f32[1,32], index: 4, kind: input, shape index: {}]
  %s5 = inlined_call_operand.vmem [shape: f32[32,32], index: 5, kind: input, shape index: {}]
  %s6 = inlined_call_operand.vmem [shape: f32[1,32], index: 6, kind: input, shape index: {}]
  %s7 = inlined_call_operand.hbm [shape: f32[2,16,32], index: 7, kind: output, shape index: {}]
  %s8 = sld [smem:[#allocation0]]
  $region65: #{tpu_custom_call.1} parent=0
    _
  %s10 = ssub.s32 1, %s8
  %s11 = scalar_select 0, %s10, %s8
  $region1: #{tpu_custom_call.1} parent=0
    #allocation2 [shape = 'u8[16384]{0}', space=vmem, size = 0x4000, scoped, tag = 'output window, operand 0']
    #allocation3 [shape = 's32[2]{0}', space=sflag, size = 0x8, scoped, tag = 'scoped memory for tpu_custom_call.1']
    %12 = vsyncpa [#allocation3], 0
    %s13 = scalar_lea.sflag [#allocation3], 1
    %14 = vsyncpa %s13, 0
    loop: start=0, step=1, limit=6
    $region2: #{tpu_custom_call.1} parent=1 // loop_pre_header
      _
    $region3: #{tpu_custom_call.1} parent=1 // loop_header
      %s16 = sphi 0, %s20
      %p17 = scmp.ge.s32.totalorder %s16, 6
      %s23 = sphi 0, %s35
      %s24 = sphi 0, %s31
      %s25 = sphi 0, %s23
      %s26 = sphi 0, %s24
      %s27 = sphi 0, %s25
      %s28 = sphi 0, %s26
      %s42 = sphi 0, %s44
      %s45 = sphi 0, %s42
      %s46 = sphi 0, %s45
      %s62 = sphi 0, %s46
      %s72 = sphi 0, %s74
      %s75 = sphi 0, %s72
      %s76 = sphi 0, %s75
      %s92 = sphi 0, %s76
      %s102 = sphi 0, %s104
      %s105 = sphi 0, %s102
      %s106 = sphi 0, %s105
      %s122 = sphi 0, %s106
      %s126 = sphi 0, %s126
      %s128 = sphi 0, %s126
      %s129 = sphi 0, %s128
      %s143 = sphi 0, %s129
      %s147 = sphi 0, %s147
      %s149 = sphi 0, %s147
      %s150 = sphi 0, %s149
      %s164 = sphi 0, %s150
      %s168 = sphi 0, %s168
      %s170 = sphi 0, %s168
      %s171 = sphi 0, %s170
      %s185 = sphi 0, %s171
      %s189 = sphi 0, %s189
      %s191 = sphi 0, %s189
      %s192 = sphi 0, %s191
      %s206 = sphi 0, %s192
      %s212 = sphi 0, %s214
      %s215 = sphi 0, %s212
      %s216 = sphi 0, %s215
      %s232 = sphi 0, %s216
    $region4: #{tpu_custom_call.1} parent=1 // loop_header_branch
      %19 = sbr.rel (%p17) target = $region8
    $region5: #{tpu_custom_call.1} parent=1 // loop_body
      %s21 = ssub.s32 %s16, 1
      %s22 = ssub.s32 %s16, 2
      %s29 = sadd.s32 1, %s24
      %p30 = scmp.ge.s32.totalorder %s29, 2
      %s31 = scalar_select %p30, 0, %s29
      %s32 = sadd.s32 1, %s23
      %s33 = scalar_select %p30, %s32, %s23
      %p34 = scmp.ge.s32.totalorder %s33, 2
      %s35 = scalar_select %p34, 0, %s33
      %s36 = smul.u32 %s23, 2
      %s37 = sadd.s32 %s36, %s24
      %s38 = smul.u32 %s35, 2
      %s39 = sadd.s32 %s38, %s31
      %s40 = ssub.s32 %s37, %s39
      %p41 = scmp.eq.s32.totalorder %s40, 0
      %s43 = sadd.s32 %s42, 1
      %s44 = scalar_select %p41, %s42, %s43
      %p47 = pneg %p41
      %p48 = scmp.eq.s32.totalorder %s16, 3
      %p49 = por %p47, %p48
      %p50 = scmp.ne.s32.totalorder %s42, %s45
      %p51 = scmp.eq.s32.totalorder %s16, 0
      %p52 = por %p50, %p51
      %p53 = scmp.ne.s32.totalorder %s42, %s45
      %p54 = scmp.eq.s32.totalorder %s21, 3
      %p55 = por %p53, %p54
      %p56 = scmp.ne.s32.totalorder %s45, %s46
      %p57 = scmp.eq.s32.totalorder %s21, 0
      %p58 = por %p56, %p57
      %p59 = scmp.ne.s32.totalorder %s45, %s46
      %p60 = scmp.eq.s32.totalorder %s22, 3
      %p61 = por %p59, %p60
      %p63 = scmp.ne.s32.totalorder %s46, %s62
      %p64 = scmp.eq.s32.totalorder %s22, 0
      %p65 = por %p63, %p64
      %s66 = smul.u32 %s23, 2
      %s67 = sadd.s32 %s66, %s24
      %s68 = smul.u32 %s35, 2
      %s69 = sadd.s32 %s68, %s31
      %s70 = ssub.s32 %s67, %s69
      %p71 = scmp.eq.s32.totalorder %s70, 0
      %s73 = sadd.s32 %s72, 1
      %s74 = scalar_select %p71, %s72, %s73
      %p77 = pneg %p71
      %p78 = scmp.eq.s32.totalorder %s16, 3
      %p79 = por %p77, %p78
      %p80 = scmp.ne.s32.totalorder %s72, %s75
      %p81 = scmp.eq.s32.totalorder %s16, 0
      %p82 = por %p80, %p81
      %p83 = scmp.ne.s32.totalorder %s72, %s75
      %p84 = scmp.eq.s32.totalorder %s21, 3
      %p85 = por %p83, %p84
      %p86 = scmp.ne.s32.totalorder %s75, %s76
      %p87 = scmp.eq.s32.totalorder %s21, 0
      %p88 = por %p86, %p87
      %p89 = scmp.ne.s32.totalorder %s75, %s76
      %p90 = scmp.eq.s32.totalorder %s22, 3
      %p91 = por %p89, %p90
      %p93 = scmp.ne.s32.totalorder %s76, %s92
      %p94 = scmp.eq.s32.totalorder %s22, 0
      %p95 = por %p93, %p94
      %s96 = smul.u32 %s23, 2
      %s97 = sadd.s32 %s96, %s24
      %s98 = smul.u32 %s35, 2
      %s99 = sadd.s32 %s98, %s31
      %s100 = ssub.s32 %s97, %s99
      %p101 = scmp.eq.s32.totalorder %s100, 0
      %s103 = sadd.s32 %s102, 1
      %s104 = scalar_select %p101, %s102, %s103
      %p107 = pneg %p101
      %p108 = scmp.eq.s32.totalorder %s16, 3
      %p109 = por %p107, %p108
      %p110 = scmp.ne.s32.totalorder %s102, %s105
      %p111 = scmp.eq.s32.totalorder %s16, 0
      %p112 = por %p110, %p111
      %p113 = scmp.ne.s32.totalorder %s102, %s105
      %p114 = scmp.eq.s32.totalorder %s21, 3
      %p115 = por %p113, %p114
      %p116 = scmp.ne.s32.totalorder %s105, %s106
      %p117 = scmp.eq.s32.totalorder %s21, 0
      %p118 = por %p116, %p117
      %p119 = scmp.ne.s32.totalorder %s105, %s106
      %p120 = scmp.eq.s32.totalorder %s22, 3
      %p121 = por %p119, %p120
      %p123 = scmp.ne.s32.totalorder %s106, %s122
      %p124 = scmp.eq.s32.totalorder %s22, 0
      %p125 = por %p123, %p124
      %s127 = sadd.s32 %s126, 1
      %p130 = scmp.eq.s32.totalorder %s16, 3
      %p131 = scmp.ne.s32.totalorder %s126, %s128
      %p132 = scmp.eq.s32.totalorder %s16, 0
      %p133 = por %p131, %p132
      %p134 = scmp.ne.s32.totalorder %s126, %s128
      %p135 = scmp.eq.s32.totalorder %s21, 3
      %p136 = por %p134, %p135
      %p137 = scmp.ne.s32.totalorder %s128, %s129
      %p138 = scmp.eq.s32.totalorder %s21, 0
      %p139 = por %p137, %p138
      %p140 = scmp.ne.s32.totalorder %s128, %s129
      %p141 = scmp.eq.s32.totalorder %s22, 3
      %p142 = por %p140, %p141
      %p144 = scmp.ne.s32.totalorder %s129, %s143
      %p145 = scmp.eq.s32.totalorder %s22, 0
      %p146 = por %p144, %p145
      %s148 = sadd.s32 %s147, 1
      %p151 = scmp.eq.s32.totalorder %s16, 3
      %p152 = scmp.ne.s32.totalorder %s147, %s149
      %p153 = scmp.eq.s32.totalorder %s16, 0
      %p154 = por %p152, %p153
      %p155 = scmp.ne.s32.totalorder %s147, %s149
      %p156 = scmp.eq.s32.totalorder %s21, 3
      %p157 = por %p155, %p156
      %p158 = scmp.ne.s32.totalorder %s149, %s150
      %p159 = scmp.eq.s32.totalorder %s21, 0
      %p160 = por %p158, %p159
      %p161 = scmp.ne.s32.totalorder %s149, %s150
      %p162 = scmp.eq.s32.totalorder %s22, 3
      %p163 = por %p161, %p162
      %p165 = scmp.ne.s32.totalorder %s150, %s164
      %p166 = scmp.eq.s32.totalorder %s22, 0
      %p167 = por %p165, %p166
      %s169 = sadd.s32 %s168, 1
      %p172 = scmp.eq.s32.totalorder %s16, 3
      %p173 = scmp.ne.s32.totalorder %s168, %s170
      %p174 = scmp.eq.s32.totalorder %s16, 0
      %p175 = por %p173, %p174
      %p176 = scmp.ne.s32.totalorder %s168, %s170
      %p177 = scmp.eq.s32.totalorder %s21, 3
      %p178 = por %p176, %p177
      %p179 = scmp.ne.s32.totalorder %s170, %s171
      %p180 = scmp.eq.s32.totalorder %s21, 0
      %p181 = por %p179, %p180
      %p182 = scmp.ne.s32.totalorder %s170, %s171
      %p183 = scmp.eq.s32.totalorder %s22, 3
      %p184 = por %p182, %p183
      %p186 = scmp.ne.s32.totalorder %s171, %s185
      %p187 = scmp.eq.s32.totalorder %s22, 0
      %p188 = por %p186, %p187
      %s190 = sadd.s32 %s189, 1
      %p193 = scmp.eq.s32.totalorder %s16, 3
      %p194 = scmp.ne.s32.totalorder %s189, %s191
      %p195 = scmp.eq.s32.totalorder %s16, 0
      %p196 = por %p194, %p195
      %p197 = scmp.ne.s32.totalorder %s189, %s191
      %p198 = scmp.eq.s32.totalorder %s21, 3
      %p199 = por %p197, %p198
      %p200 = scmp.ne.s32.totalorder %s191, %s192
      %p201 = scmp.eq.s32.totalorder %s21, 0
      %p202 = por %p200, %p201
      %p203 = scmp.ne.s32.totalorder %s191, %s192
      %p204 = scmp.eq.s32.totalorder %s22, 3
      %p205 = por %p203, %p204
      %p207 = scmp.ne.s32.totalorder %s192, %s206
      %p208 = scmp.eq.s32.totalorder %s22, 0
      %p209 = por %p207, %p208
      %s210 = ssub.s32 %s23, %s35
      %p211 = scmp.eq.s32.totalorder %s210, 0
      %s213 = sadd.s32 %s212, 1
      %s214 = scalar_select %p211, %s212, %s213
      %p217 = pneg %p211
      %p218 = scmp.eq.s32.totalorder %s16, 3
      %p219 = por %p217, %p218
      %p220 = scmp.ne.s32.totalorder %s212, %s215
      %p221 = scmp.eq.s32.totalorder %s16, 0
      %p222 = por %p220, %p221
      %p223 = scmp.ne.s32.totalorder %s212, %s215
      %p224 = scmp.eq.s32.totalorder %s21, 3
      %p225 = por %p223, %p224
      %p226 = scmp.ne.s32.totalorder %s215, %s216
      %p227 = scmp.eq.s32.totalorder %s21, 0
      %p228 = por %p226, %p227
      %p229 = scmp.ne.s32.totalorder %s215, %s216
      %p230 = scmp.eq.s32.totalorder %s22, 3
      %p231 = por %p229, %p230
      %p233 = scmp.ne.s32.totalorder %s216, %s232
      %p234 = scmp.eq.s32.totalorder %s22, 0
      %p235 = por %p233, %p234
      %p236 = scmp.le.s32.totalorder 1, %s16
      %p237 = scmp.lt.s32.totalorder %s16, 5
      %p238 = pnand %p236, %p237
      %p239 = pneg %p238
      // Predicated region
      $region9: #{tpu_custom_call.1} parent=5 // pred_check
        _
      $region10: #{tpu_custom_call.1} parent=5 // pred_check_branch
        %241 = sbr.rel (%p238) target = $region12
      $region11: #{tpu_custom_call.1} parent=5 // pred_region
        %s242 = ssub.s32 %s16, 1
        // Predicated region
        $region13: #{tpu_custom_call.1} parent=11 // pred_check
          %p243 = pneg %p139
        $region14: #{tpu_custom_call.1} parent=11 // pred_check_branch
          %245 = sbr.rel (%p243) target = $region16
        $region15: #{tpu_custom_call.1} parent=11 // pred_region
          _
        $region16: #{tpu_custom_call.1} parent=11 // pred_fallthru
          _
        // Predicated region
        $region17: #{tpu_custom_call.1} parent=11 // pred_check
          %p246 = pneg %p160
        $region18: #{tpu_custom_call.1} parent=11 // pred_check_branch
          %248 = sbr.rel (%p246) target = $region20
        $region19: #{tpu_custom_call.1} parent=11 // pred_region
          _
        $region20: #{tpu_custom_call.1} parent=11 // pred_fallthru
          _
        // Predicated region
        $region21: #{tpu_custom_call.1} parent=11 // pred_check
          %p249 = pneg %p181
        $region22: #{tpu_custom_call.1} parent=11 // pred_check_branch
          %251 = sbr.rel (%p249) target = $region24
        $region23: #{tpu_custom_call.1} parent=11 // pred_region
          _
        $region24: #{tpu_custom_call.1} parent=11 // pred_fallthru
          _
        // Predicated region
        $region25: #{tpu_custom_call.1} parent=11 // pred_check
          %p252 = pneg %p202
        $region26: #{tpu_custom_call.1} parent=11 // pred_check_branch
          %254 = sbr.rel (%p252) target = $region28
        $region27: #{tpu_custom_call.1} parent=11 // pred_region
          _
        $region28: #{tpu_custom_call.1} parent=11 // pred_fallthru
          _
      $region12: #{tpu_custom_call.1} parent=5 // pred_fallthru
        _
      %p255 = scmp.lt.s32.totalorder %s16, 4
      // Predicated region
      $region29: #{tpu_custom_call.1} parent=5 // pred_check
        %p256 = pneg %p255
      $region30: #{tpu_custom_call.1} parent=5 // pred_check_branch
        %258 = sbr.rel (%p256) target = $region32
      $region31: #{tpu_custom_call.1} parent=5 // pred_region
        // Predicated region
        $region33: #{tpu_custom_call.1} parent=31 // pred_check
          %p259 = pneg %p52
        $region34: #{tpu_custom_call.1} parent=31 // pred_check_branch
          %261 = sbr.rel (%p259) target = $region36
        $region35: #{tpu_custom_call.1} parent=31 // pred_region
          %s262 = smul.u32 %s23, 2
          %s263 = sadd.s32 %s262, %s24
          %p264 = scmp.lt.s32.totalorder %s263, 3
          %s265 = scalar_select %p264, %s263, 3
          %s266 = scalar_lea.vmem %s0, %s265
          %s267 = smul.u32 %s23, 2
          %s268 = sadd.s32 %s267, %s24
        $region36: #{tpu_custom_call.1} parent=31 // pred_fallthru
          _
        // Predicated region
        $region37: #{tpu_custom_call.1} parent=31 // pred_check
          %p269 = pneg %p82
        $region38: #{tpu_custom_call.1} parent=31 // pred_check_branch
          %271 = sbr.rel (%p269) target = $region40
        $region39: #{tpu_custom_call.1} parent=31 // pred_region
          %s272 = smul.u32 %s23, 2
          %s273 = sadd.s32 %s272, %s24
          %s274 = smul.u32 16, %s273
          %p275 = scmp.lt.s32.totalorder %s274, 63
          %s276 = scalar_select %p275, %s274, 63
          %s277 = smul.addr %s276, 8
          %s278 = scalar_lea.vmem %s1, %s277
          %s279 = smul.u32 %s23, 2
          %s280 = sadd.s32 %s279, %s24
          %s281 = smul.u32 16, %s280
        $region40: #{tpu_custom_call.1} parent=31 // pred_fallthru
          _
        // Predicated region
        $region41: #{tpu_custom_call.1} parent=31 // pred_check
          %p282 = pneg %p112
        $region42: #{tpu_custom_call.1} parent=31 // pred_check_branch
          %284 = sbr.rel (%p282) target = $region44
        $region43: #{tpu_custom_call.1} parent=31 // pred_region
          %s285 = smul.u32 %s23, 2
          %s286 = sadd.s32 %s285, %s24
          %s287 = smul.u32 16, %s286
          %p288 = scmp.lt.s32.totalorder %s287, 63
          %s289 = scalar_select %p288, %s287, 63
          %s290 = smul.addr %s289, 8
          %s291 = scalar_lea.vmem %s2, %s290
          %s292 = smul.u32 %s23, 2
          %s293 = sadd.s32 %s292, %s24
          %s294 = smul.u32 16, %s293
        $region44: #{tpu_custom_call.1} parent=31 // pred_fallthru
          _
      $region32: #{tpu_custom_call.1} parent=5 // pred_fallthru
        _
      %p295 = scmp.le.s32.totalorder 1, %s16
      %p296 = scmp.lt.s32.totalorder %s16, 5
      %p297 = pnand %p295, %p296
      %p298 = pneg %p297
      // Predicated region
      $region45: #{tpu_custom_call.1} parent=5 // pred_check
        _
      $region46: #{tpu_custom_call.1} parent=5 // pred_check_branch
        %300 = sbr.rel (%p297) target = $region48
      $region47: #{tpu_custom_call.1} parent=5 // pred_region
        %s301 = ssub.s32 %s16, 1
        %s302 = smul.u32 %s25, 2
        %s303 = sadd.s32 %s302, %s26
        %p304 = scmp.lt.s32.totalorder %s303, 3
        %s305 = scalar_select %p304, %s303, 3
        %s306 = scalar_lea.vmem %s0, %s305
        %p307 = pneg %p58
        %p308 = pneg %p55
        %s309 = smul.u32 %s25, 2
        %s310 = sadd.s32 %s309, %s26
        %s311 = smul.u32 16, %s310
        %p312 = scmp.lt.s32.totalorder %s311, 63
        %s313 = scalar_select %p312, %s311, 63
        %s314 = smul.addr %s313, 8
        %s315 = scalar_lea.vmem %s1, %s314
        %p316 = pneg %p88
        %p317 = pneg %p85
        %s318 = smul.u32 %s25, 2
        %s319 = sadd.s32 %s318, %s26
        %s320 = smul.u32 16, %s319
        %p321 = scmp.lt.s32.totalorder %s320, 63
        %s322 = scalar_select %p321, %s320, 63
        %s323 = smul.addr %s322, 8
        %s324 = scalar_lea.vmem %s2, %s323
        %p325 = pneg %p118
        %p326 = pneg %p115
        %p327 = pneg %p139
        %p328 = pneg %p136
        %p329 = pneg %p160
        %p330 = pneg %p157
        %p331 = pneg %p181
        %p332 = pneg %p178
        %p333 = pneg %p202
        %p334 = pneg %p199
        %p335 = pneg %p228
        %p336 = pneg %p225
        %s337 = sand.u32 %s215, 1
        %s338 = scalar_lea.sflag [#allocation3], %s337
        %s339 = sand.u32 %s215, 1
        %s340 = smul.addr %s339, 16
        %s341 = scalar_lea.vmem [#allocation2], %s340
        %s342 = smul.u32 %s25, 2
        %s343 = sadd.s32 %s342, %s26
        %p344 = scmp.lt.s32.totalorder %s343, 3
        %s345 = scalar_select %p344, %s343, 3
        %s346 = scalar_lea.vmem %s0, %s345
        %s347 = smul.u32 %s25, 2
        %s348 = sadd.s32 %s347, %s26
        %s349 = smul.u32 %s25, 2
        %s350 = sadd.s32 %s349, %s26
        %s351 = smul.u32 16, %s350
        %p352 = scmp.lt.s32.totalorder %s351, 63
        %s353 = scalar_select %p352, %s351, 63
        %s354 = smul.addr %s353, 8
        %s355 = scalar_lea.vmem %s1, %s354
        %s356 = smul.u32 %s25, 2
        %s357 = sadd.s32 %s356, %s26
        %s358 = smul.u32 16, %s357
        %s359 = smul.u32 %s25, 2
        %s360 = sadd.s32 %s359, %s26
        %s361 = smul.u32 16, %s360
        %p362 = scmp.lt.s32.totalorder %s361, 63
        %s363 = scalar_select %p362, %s361, 63
        %s364 = smul.addr %s363, 8
        %s365 = scalar_lea.vmem %s2, %s364
        %s366 = smul.u32 %s25, 2
        %s367 = sadd.s32 %s366, %s26
        %s368 = smul.u32 16, %s367
        %p369 = scmp.eq.s32.totalorder %s26, 0
        // Predicated region
        $region49: #{tpu_custom_call.1} parent=47 // pred_check
          %p370 = pneg %p369
        $region50: #{tpu_custom_call.1} parent=47 // pred_check_branch
          %372 = sbr.rel (%p370) target = $region52
        $region51: #{tpu_custom_call.1} parent=47 // pred_region
          %vm373 = vcmask 261120
          %374 = vst.msk [vmem:[%s341] sm:$0xff] %vm373, 0.0
          %375 = vst.msk [vmem:[%s341 + $0x8] sm:$0xff] %vm373, 0.0
        $region52: #{tpu_custom_call.1} parent=47 // pred_fallthru
          _
        %v376 = vld [vmem:[%s355] sm:$0xff]
        %v377 = vld [vmem:[%s355 + $0x8] sm:$0xff]
        %v378 = vld [vmem:[%s355 + $0x10] sm:$0xff]
        %v379 = vld [vmem:[%s355 + $0x18] sm:$0xff]
        %v380 = vld [vmem:[%s355 + $0x20] sm:$0xff]
        %v381 = vld [vmem:[%s355 + $0x28] sm:$0xff]
        %v382 = vld [vmem:[%s355 + $0x30] sm:$0xff]
        %v383 = vld [vmem:[%s355 + $0x38] sm:$0xff]
        %v384 = vld [vmem:[%s355 + $0x40] sm:$0xff]
        %v385 = vld [vmem:[%s355 + $0x48] sm:$0xff]
        %v386 = vld [vmem:[%s355 + $0x50] sm:$0xff]
        %v387 = vld [vmem:[%s355 + $0x58] sm:$0xff]
        %v388 = vld [vmem:[%s355 + $0x60] sm:$0xff]
        %v389 = vld [vmem:[%s355 + $0x68] sm:$0xff]
        %v390 = vld [vmem:[%s355 + $0x70] sm:$0xff]
        %v391 = vld [vmem:[%s355 + $0x78] sm:$0xff]
        %v392 = vld [vmem:[%s3] sm:$0xff]
        %v393 = vld [vmem:[%s3 + $0x8] sm:$0xff]
        %v394 = vld [vmem:[%s4] sm:$0x1]
        %v396 = vlaneseq
        %v397 = vshrl.u32 %v396, 7
        %v398 = vsub.s32 0, %v397
        %v399 = vrot.slane %v394, %v398
        %vm401 = vcmask 130048
        %v403 = vsel %vm401, %v376, 0
        %v406 = vsel %vm401, %v377, 0
        %v409 = vsel %vm401, %v378, 0
        %v412 = vsel %vm401, %v379, 0
        %v415 = vsel %vm401, %v380, 0
        %v418 = vsel %vm401, %v381, 0
        %v421 = vsel %vm401, %v382, 0
        %v424 = vsel %vm401, %v383, 0
        %v427 = vsel %vm401, %v384, 0
        %v430 = vsel %vm401, %v385, 0
        %v433 = vsel %vm401, %v386, 0
        %v436 = vsel %vm401, %v387, 0
        %v439 = vsel %vm401, %v388, 0
        %v442 = vsel %vm401, %v389, 0
        %v445 = vsel %vm401, %v390, 0
        %v448 = vsel %vm401, %v391, 0
        %450 = vmatprep.subr.mxu0 0.0
        %451 = vmatpush1.msra.mxu0 %v392
        %452 = vmatprep.subr.mxu0 0.0
        %453 = vmatpush1.msra.mxu0 %v393
        %454 = vmatprep.subr.mxu0 0.0
        %455 = vmatpush1.msra.mxu0 0.0
        %456 = vmatprep.subr.mxu0 0.0
        %457 = vmatpush1.msra.mxu0 0.0
        %458 = vmatprep.subr.mxu0 0.0
        %459 = vmatpush1.msra.mxu0 0.0
        %460 = vmatprep.subr.mxu0 0.0
        %461 = vmatpush1.msra.mxu0 0.0
        %462 = vmatprep.subr.mxu0 0.0
        %463 = vmatpush1.msra.mxu0 0.0
        %464 = vmatprep.subr.mxu0 0.0
        %465 = vmatpush1.msra.mxu0 0.0
        %466 = vmatprep.subr.mxu0 0.0
        %467 = vmatpush1.msra.mxu0 0.0
        %468 = vmatprep.subr.mxu0 0.0
        %469 = vmatpush1.msra.mxu0 0.0
        %470 = vmatprep.subr.mxu0 0.0
        %471 = vmatpush1.msra.mxu0 0.0
        %472 = vmatprep.subr.mxu0 0.0
        %473 = vmatpush1.msra.mxu0 0.0
        %474 = vmatprep.subr.mxu0 0.0
        %475 = vmatpush1.msra.mxu0 0.0
        %476 = vmatprep.subr.mxu0 0.0
        %477 = vmatpush1.msra.mxu0 0.0
        %478 = vmatprep.subr.mxu0 0.0
        %479 = vmatpush1.msra.mxu0 0.0
        %480 = vmatprep.subr.mxu0 0.0
        %481 = vmatpush1.msra.mxu0 0.0
        %482 = vmatprep.subr.mxu0 0.0
        %483 = vmatpush1.msra.mxu0 0.0
        %484 = vmatprep.subr.mxu0 0.0
        %485 = vmatpush1.msra.mxu0 0.0
        %486 = vmatprep.subr.mxu0 0.0
        %487 = vmatpush1.msra.mxu0 0.0
        %488 = vmatprep.subr.mxu0 0.0
        %489 = vmatpush1.msra.mxu0 0.0
        %490 = vmatprep.subr.mxu0 0.0
        %491 = vmatpush1.msra.mxu0 0.0
        %492 = vmatprep.subr.mxu0 0.0
        %493 = vmatpush1.msra.mxu0 0.0
        %494 = vmatprep.subr.mxu0 0.0
        %495 = vmatpush1.msra.mxu0 0.0
        %496 = vmatprep.subr.mxu0 0.0
        %497 = vmatpush1.msra.mxu0 0.0
        %498 = vmatprep.subr.mxu0 0.0
        %499 = vmatpush1.msra.mxu0 0.0
        %500 = vmatprep.subr.mxu0 0.0
        %501 = vmatpush1.msra.mxu0 0.0
        %502 = vmatprep.subr.mxu0 0.0
        %503 = vmatpush1.msra.mxu0 0.0
        %504 = vmatprep.subr.mxu0 0.0
        %505 = vmatpush1.msra.mxu0 0.0
        %506 = vmatprep.subr.mxu0 0.0
        %507 = vmatpush1.msra.mxu0 0.0
        %508 = vmatprep.subr.mxu0 0.0
        %509 = vmatpush1.msra.mxu0 0.0
        %510 = vmatprep.subr.mxu0 0.0
        %511 = vmatpush1.msra.mxu0 0.0
        %512 = vmatprep.subr.mxu0 0.0
        %513 = vmatpush1.msra.mxu0 0.0
        %514 = vmatprep.mubr.f32.mxu0 0.0
        %515 = vmatmul.mubr.f32.gmra.mrb[0].mxu0 %v403
        %v516 = vpop.f32.mrb[0].mxu0
        %v517 = vadd.f32 %v399, %v516
        %v518 = vpop.f32.mrb[0].mxu0
        %519 = vmatprep.mubr.f32.mxu0 0.0
        %520 = vmatmul.mubr.f32.gmra.mrb[0].mxu0 %v406
        %v521 = vpop.f32.mrb[0].mxu0
        %v522 = vadd.f32 %v399, %v521
        %v523 = vpop.f32.mrb[0].mxu0
        %524 = vmatprep.mubr.f32.mxu0 0.0
        %525 = vmatmul.mubr.f32.gmra.mrb[0].mxu0 %v409
        %v526 = vpop.f32.mrb[0].mxu0
        %v527 = vadd.f32 %v399, %v526
        %v528 = vpop.f32.mrb[0].mxu0
        %529 = vmatprep.mubr.f32.mxu0 0.0
        %530 = vmatmul.mubr.f32.gmra.mrb[0].mxu0 %v412
        %v531 = vpop.f32.mrb[0].mxu0
        %v532 = vadd.f32 %v399, %v531
        %v533 = vpop.f32.mrb[0].mxu0
        %534 = vmatprep.mubr.f32.mxu0 0.0
        %535 = vmatmul.mubr.f32.gmra.mrb[0].mxu0 %v415
        %v536 = vpop.f32.mrb[0].mxu0
        %v537 = vadd.f32 %v399, %v536
        %v538 = vpop.f32.mrb[0].mxu0
        %539 = vmatprep.mubr.f32.mxu0 0.0
        %540 = vmatmul.mubr.f32.gmra.mrb[0].mxu0 %v418
        %v541 = vpop.f32.mrb[0].mxu0
        %v542 = vadd.f32 %v399, %v541
        %v543 = vpop.f32.mrb[0].mxu0
        %544 = vmatprep.mubr.f32.mxu0 0.0
        %545 = vmatmul.mubr.f32.gmra.mrb[0].mxu0 %v421
        %v546 = vpop.f32.mrb[0].mxu0
        %v547 = vadd.f32 %v399, %v546
        %v548 = vpop.f32.mrb[0].mxu0
        %549 = vmatprep.mubr.f32.mxu0 0.0
        %550 = vmatmul.mubr.f32.gmra.mrb[0].mxu0 %v424
        %v551 = vpop.f32.mrb[0].mxu0
        %v552 = vadd.f32 %v399, %v551
        %v553 = vpop.f32.mrb[0].mxu0
        %554 = vmatprep.mubr.f32.mxu0 0.0
        %555 = vmatmul.mubr.f32.gmra.mrb[0].mxu0 %v427
        %v556 = vpop.f32.mrb[0].mxu0
        %v557 = vadd.f32 %v399, %v556
        %v558 = vpop.f32.mrb[0].mxu0
        %559 = vmatprep.mubr.f32.mxu0 0.0
        %560 = vmatmul.mubr.f32.gmra.mrb[0].mxu0 %v430
        %v561 = vpop.f32.mrb[0].mxu0
        %v562 = vadd.f32 %v399, %v561
        %v563 = vpop.f32.mrb[0].mxu0
        %564 = vmatprep.mubr.f32.mxu0 0.0
        %565 = vmatmul.mubr.f32.gmra.mrb[0].mxu0 %v433
        %v566 = vpop.f32.mrb[0].mxu0
        %v567 = vadd.f32 %v399, %v566
        %v568 = vpop.f32.mrb[0].mxu0
        %569 = vmatprep.mubr.f32.mxu0 0.0
        %570 = vmatmul.mubr.f32.gmra.mrb[0].mxu0 %v436
        %v571 = vpop.f32.mrb[0].mxu0
        %v572 = vadd.f32 %v399, %v571
        %v573 = vpop.f32.mrb[0].mxu0
        %574 = vmatprep.mubr.f32.mxu0 0.0
        %575 = vmatmul.mubr.f32.gmra.mrb[0].mxu0 %v439
        %v576 = vpop.f32.mrb[0].mxu0
        %v577 = vadd.f32 %v399, %v576
        %v578 = vpop.f32.mrb[0].mxu0
        %579 = vmatprep.mubr.f32.mxu0 0.0
        %580 = vmatmul.mubr.f32.gmra.mrb[0].mxu0 %v442
        %v581 = vpop.f32.mrb[0].mxu0
        %v582 = vadd.f32 %v399, %v581
        %v583 = vpop.f32.mrb[0].mxu0
        %584 = vmatprep.mubr.f32.mxu0 0.0
        %585 = vmatmul.mubr.f32.gmra.mrb[0].mxu0 %v445
        %v586 = vpop.f32.mrb[0].mxu0
        %v587 = vadd.f32 %v399, %v586
        %v588 = vpop.f32.mrb[0].mxu0
        %589 = vmatprep.mubr.f32.mxu0 0.0
        %590 = vmatmul.mubr.f32.gmra.mrb[0].mxu0 %v448
        %v591 = vpop.f32.mrb[0].mxu0
        %v592 = vadd.f32 %v399, %v591
        %v593 = vpop.f32.mrb[0].mxu0
        %594 = vdwg.mxu0
        %v595 = vmax.f32 %v517, 0.0
        %v596 = vmax.f32 %v522, 0.0
        %v597 = vmax.f32 %v527, 0.0
        %v598 = vmax.f32 %v532, 0.0
        %v599 = vmax.f32 %v537, 0.0
        %v600 = vmax.f32 %v542, 0.0
        %v601 = vmax.f32 %v547, 0.0
        %v602 = vmax.f32 %v552, 0.0
        %v603 = vmax.f32 %v557, 0.0
        %v604 = vmax.f32 %v562, 0.0
        %v605 = vmax.f32 %v567, 0.0
        %v606 = vmax.f32 %v572, 0.0
        %v607 = vmax.f32 %v577, 0.0
        %v608 = vmax.f32 %v582, 0.0
        %v609 = vmax.f32 %v587, 0.0
        %v610 = vmax.f32 %v592, 0.0
        %v611 = vand.u32 2147483647, %v517
        %v612 = vand.u32 2147483647, %v522
        %v613 = vand.u32 2147483647, %v527
        %v614 = vand.u32 2147483647, %v532
        %v615 = vand.u32 2147483647, %v537
        %v616 = vand.u32 2147483647, %v542
        %v617 = vand.u32 2147483647, %v547
        %v618 = vand.u32 2147483647, %v552
        %v619 = vand.u32 2147483647, %v557
        %v620 = vand.u32 2147483647, %v562
        %v621 = vand.u32 2147483647, %v567
        %v622 = vand.u32 2147483647, %v572
        %v623 = vand.u32 2147483647, %v577
        %v624 = vand.u32 2147483647, %v582
        %v625 = vand.u32 2147483647, %v587
        %v626 = vand.u32 2147483647, %v592
        %v627 = vsub.f32 0.0, %v611
        %v628 = vsub.f32 0.0, %v612
        %v629 = vsub.f32 0.0, %v613
        %v630 = vsub.f32 0.0, %v614
        %v631 = vsub.f32 0.0, %v615
        %v632 = vsub.f32 0.0, %v616
        %v633 = vsub.f32 0.0, %v617
        %v634 = vsub.f32 0.0, %v618
        %v635 = vsub.f32 0.0, %v619
        %v636 = vsub.f32 0.0, %v620
        %v637 = vsub.f32 0.0, %v621
        %v638 = vsub.f32 0.0, %v622
        %v639 = vsub.f32 0.0, %v623
        %v640 = vsub.f32 0.0, %v624
        %v641 = vsub.f32 0.0, %v625
        %v642 = vsub.f32 0.0, %v626
        %v643 = vmul.f32 %v627, 1.442695
        %v644 = vpow.pop %v643
        %v645 = vmul.f32 %v628, 1.442695
        %v646 = vpow.pop %v645
        %v647 = vmul.f32 %v629, 1.442695
        %v648 = vpow.pop %v647
        %v649 = vmul.f32 %v630, 1.442695
        %v650 = vpow.pop %v649
        %v651 = vmul.f32 %v631, 1.442695
        %v652 = vpow.pop %v651
        %v653 = vmul.f32 %v632, 1.442695
        %v654 = vpow.pop %v653
        %v655 = vmul.f32 %v633, 1.442695
        %v656 = vpow.pop %v655
        %v657 = vmul.f32 %v634, 1.442695
        %v658 = vpow.pop %v657
        %v659 = vmul.f32 %v635, 1.442695
        %v660 = vpow.pop %v659
        %v661 = vmul.f32 %v636, 1.442695
        %v662 = vpow.pop %v661
        %v663 = vmul.f32 %v637, 1.442695
        %v664 = vpow.pop %v663
        %v665 = vmul.f32 %v638, 1.442695
        %v666 = vpow.pop %v665
        %v667 = vmul.f32 %v639, 1.442695
        %v668 = vpow.pop %v667
        %v669 = vmul.f32 %v640, 1.442695
        %v670 = vpow.pop %v669
        %v671 = vmul.f32 %v641, 1.442695
        %v672 = vpow.pop %v671
        %v673 = vmul.f32 %v642, 1.442695
        %v674 = vpow.pop %v673
        %v675 = vadd.f32 %v644, 1.0
        %v676 = vadd.f32 %v646, 1.0
        %v677 = vadd.f32 %v648, 1.0
        %v678 = vadd.f32 %v650, 1.0
        %v679 = vadd.f32 %v652, 1.0
        %v680 = vadd.f32 %v654, 1.0
        %v681 = vadd.f32 %v656, 1.0
        %v682 = vadd.f32 %v658, 1.0
        %v683 = vadd.f32 %v660, 1.0
        %v684 = vadd.f32 %v662, 1.0
        %v685 = vadd.f32 %v664, 1.0
        %v686 = vadd.f32 %v666, 1.0
        %v687 = vadd.f32 %v668, 1.0
        %v688 = vadd.f32 %v670, 1.0
        %v689 = vadd.f32 %v672, 1.0
        %v690 = vadd.f32 %v674, 1.0
        %v691 = vlog2.pop %v675
        %v692 = vmul.f32 %v691, 0.6931472
        %v693 = vlog2.pop %v676
        %v694 = vmul.f32 %v693, 0.6931472
        %v695 = vlog2.pop %v677
        %v696 = vmul.f32 %v695, 0.6931472
        %v697 = vlog2.pop %v678
        %v698 = vmul.f32 %v697, 0.6931472
        %v699 = vlog2.pop %v679
        %v700 = vmul.f32 %v699, 0.6931472
        %v701 = vlog2.pop %v680
        %v702 = vmul.f32 %v701, 0.6931472
        %v703 = vlog2.pop %v681
        %v704 = vmul.f32 %v703, 0.6931472
        %v705 = vlog2.pop %v682
        %v706 = vmul.f32 %v705, 0.6931472
        %v707 = vlog2.pop %v683
        %v708 = vmul.f32 %v707, 0.6931472
        %v709 = vlog2.pop %v684
        %v710 = vmul.f32 %v709, 0.6931472
        %v711 = vlog2.pop %v685
        %v712 = vmul.f32 %v711, 0.6931472
        %v713 = vlog2.pop %v686
        %v714 = vmul.f32 %v713, 0.6931472
        %v715 = vlog2.pop %v687
        %v716 = vmul.f32 %v715, 0.6931472
        %v717 = vlog2.pop %v688
        %v718 = vmul.f32 %v717, 0.6931472
        %v719 = vlog2.pop %v689
        %v720 = vmul.f32 %v719, 0.6931472
        %v721 = vlog2.pop %v690
        %v722 = vmul.f32 %v721, 0.6931472
        %v723 = vadd.f32 %v595, %v692
        %v724 = vadd.f32 %v596, %v694
        %v725 = vadd.f32 %v597, %v696
        %v726 = vadd.f32 %v598, %v698
        %v727 = vadd.f32 %v599, %v700
        %v728 = vadd.f32 %v600, %v702
        %v729 = vadd.f32 %v601, %v704
        %v730 = vadd.f32 %v602, %v706
        %v731 = vadd.f32 %v603, %v708
        %v732 = vadd.f32 %v604, %v710
        %v733 = vadd.f32 %v605, %v712
        %v734 = vadd.f32 %v606, %v714
        %v735 = vadd.f32 %v607, %v716
        %v736 = vadd.f32 %v608, %v718
        %v737 = vadd.f32 %v609, %v720
        %v738 = vadd.f32 %v610, %v722
        %v739 = vsub.f32 %v723, 0.6931472
        %v740 = vsub.f32 %v724, 0.6931472
        %v741 = vsub.f32 %v725, 0.6931472
        %v742 = vsub.f32 %v726, 0.6931472
        %v743 = vsub.f32 %v727, 0.6931472
        %v744 = vsub.f32 %v728, 0.6931472
        %v745 = vsub.f32 %v729, 0.6931472
        %v746 = vsub.f32 %v730, 0.6931472
        %v747 = vsub.f32 %v731, 0.6931472
        %v748 = vsub.f32 %v732, 0.6931472
        %v749 = vsub.f32 %v733, 0.6931472
        %v750 = vsub.f32 %v734, 0.6931472
        %v751 = vsub.f32 %v735, 0.6931472
        %v752 = vsub.f32 %v736, 0.6931472
        %v753 = vsub.f32 %v737, 0.6931472
        %v754 = vsub.f32 %v738, 0.6931472
        %v755 = vld [vmem:[%s5] sm:$0xff]
        %v756 = vld [vmem:[%s5 + $0x8] sm:$0xff]
        %v757 = vld [vmem:[%s5 + $0x10] sm:$0xff]
        %v758 = vld [vmem:[%s5 + $0x18] sm:$0xff]
        %v759 = vld [vmem:[%s6] sm:$0x1]
        %v761 = vlaneseq
        %v762 = vshrl.u32 %v761, 7
        %v763 = vsub.s32 0, %v762
        %v764 = vrot.slane %v759, %v763
        %vm766 = vcmask 261120
        %v768 = vsel %vm766, %v739, 0
        %v771 = vsel %vm766, %v740, 0
        %v774 = vsel %vm766, %v741, 0
        %v777 = vsel %vm766, %v742, 0
        %v780 = vsel %vm766, %v743, 0
        %v783 = vsel %vm766, %v744, 0
        %v786 = vsel %vm766, %v745, 0
        %v789 = vsel %vm766, %v746, 0
        %v792 = vsel %vm766, %v747, 0
        %v795 = vsel %vm766, %v748, 0
        %v798 = vsel %vm766, %v749, 0
        %v801 = vsel %vm766, %v750, 0
        %v804 = vsel %vm766, %v751, 0
        %v807 = vsel %vm766, %v752, 0
        %v810 = vsel %vm766, %v753, 0
        %v813 = vsel %vm766, %v754, 0
        %815 = vmatprep.subr.mxu0 0.0
        %816 = vmatpush1.msra.mxu0 %v755
        %817 = vmatprep.subr.mxu0 0.0
        %818 = vmatpush1.msra.mxu0 %v756
        %819 = vmatprep.subr.mxu0 0.0
        %820 = vmatpush1.msra.mxu0 %v757
        %821 = vmatprep.subr.mxu0 0.0
        %822 = vmatpush1.msra.mxu0 %v758
        %823 = vmatprep.subr.mxu0 0.0
        %824 = vmatpush1.msra.mxu0 0.0
        %825 = vmatprep.subr.mxu0 0.0
        %826 = vmatpush1.msra.mxu0 0.0
        %827 = vmatprep.subr.mxu0 0.0
        %828 = vmatpush1.msra.mxu0 0.0
        %829 = vmatprep.subr.mxu0 0.0
        %830 = vmatpush1.msra.mxu0 0.0
        %831 = vmatprep.subr.mxu0 0.0
        %832 = vmatpush1.msra.mxu0 0.0
        %833 = vmatprep.subr.mxu0 0.0
        %834 = vmatpush1.msra.mxu0 0.0
        %835 = vmatprep.subr.mxu0 0.0
        %836 = vmatpush1.msra.mxu0 0.0
        %837 = vmatprep.subr.mxu0 0.0
        %838 = vmatpush1.msra.mxu0 0.0
        %839 = vmatprep.subr.mxu0 0.0
        %840 = vmatpush1.msra.mxu0 0.0
        %841 = vmatprep.subr.mxu0 0.0
        %842 = vmatpush1.msra.mxu0 0.0
        %843 = vmatprep.subr.mxu0 0.0
        %844 = vmatpush1.msra.mxu0 0.0
        %845 = vmatprep.subr.mxu0 0.0
        %846 = vmatpush1.msra.mxu0 0.0
        %847 = vmatprep.subr.mxu0 0.0
        %848 = vmatpush1.msra.mxu0 0.0
        %849 = vmatprep.subr.mxu0 0.0
        %850 = vmatpush1.msra.mxu0 0.0
        %851 = vmatprep.subr.mxu0 0.0
        %852 = vmatpush1.msra.mxu0 0.0
        %853 = vmatprep.subr.mxu0 0.0
        %854 = vmatpush1.msra.mxu0 0.0
        %855 = vmatprep.subr.mxu0 0.0
        %856 = vmatpush1.msra.mxu0 0.0
        %857 = vmatprep.subr.mxu0 0.0
        %858 = vmatpush1.msra.mxu0 0.0
        %859 = vmatprep.subr.mxu0 0.0
        %860 = vmatpush1.msra.mxu0 0.0
        %861 = vmatprep.subr.mxu0 0.0
        %862 = vmatpush1.msra.mxu0 0.0
        %863 = vmatprep.subr.mxu0 0.0
        %864 = vmatpush1.msra.mxu0 0.0
        %865 = vmatprep.subr.mxu0 0.0
        %866 = vmatpush1.msra.mxu0 0.0
        %867 = vmatprep.subr.mxu0 0.0
        %868 = vmatpush1.msra.mxu0 0.0
        %869 = vmatprep.subr.mxu0 0.0
        %870 = vmatpush1.msra.mxu0 0.0
        %871 = vmatprep.subr.mxu0 0.0
        %872 = vmatpush1.msra.mxu0 0.0
        %873 = vmatprep.subr.mxu0 0.0
        %874 = vmatpush1.msra.mxu0 0.0
        %875 = vmatprep.subr.mxu0 0.0
        %876 = vmatpush1.msra.mxu0 0.0
        %877 = vmatprep.subr.mxu0 0.0
        %878 = vmatpush1.msra.mxu0 0.0
        %879 = vmatprep.mubr.f32.mxu0 0.0
        %880 = vmatmul.mubr.f32.gmra.mrb[0].mxu0 %v768
        %v881 = vpop.f32.mrb[0].mxu0
        %v882 = vadd.f32 %v764, %v881
        %v883 = vpop.f32.mrb[0].mxu0
        %884 = vmatprep.mubr.f32.mxu0 0.0
        %885 = vmatmul.mubr.f32.gmra.mrb[0].mxu0 %v771
        %v886 = vpop.f32.mrb[0].mxu0
        %v887 = vadd.f32 %v764, %v886
        %v888 = vpop.f32.mrb[0].mxu0
        %889 = vmatprep.mubr.f32.mxu0 0.0
        %890 = vmatmul.mubr.f32.gmra.mrb[0].mxu0 %v774
        %v891 = vpop.f32.mrb[0].mxu0
        %v892 = vadd.f32 %v764, %v891
        %v893 = vpop.f32.mrb[0].mxu0
        %894 = vmatprep.mubr.f32.mxu0 0.0
        %895 = vmatmul.mubr.f32.gmra.mrb[0].mxu0 %v777
        %v896 = vpop.f32.mrb[0].mxu0
        %v897 = vadd.f32 %v764, %v896
        %v898 = vpop.f32.mrb[0].mxu0
        %899 = vmatprep.mubr.f32.mxu0 0.0
        %900 = vmatmul.mubr.f32.gmra.mrb[0].mxu0 %v780
        %v901 = vpop.f32.mrb[0].mxu0
        %v902 = vadd.f32 %v764, %v901
        %v903 = vpop.f32.mrb[0].mxu0
        %904 = vmatprep.mubr.f32.mxu0 0.0
        %905 = vmatmul.mubr.f32.gmra.mrb[0].mxu0 %v783
        %v906 = vpop.f32.mrb[0].mxu0
        %v907 = vadd.f32 %v764, %v906
        %v908 = vpop.f32.mrb[0].mxu0
        %909 = vmatprep.mubr.f32.mxu0 0.0
        %910 = vmatmul.mubr.f32.gmra.mrb[0].mxu0 %v786
        %v911 = vpop.f32.mrb[0].mxu0
        %v912 = vadd.f32 %v764, %v911
        %v913 = vpop.f32.mrb[0].mxu0
        %914 = vmatprep.mubr.f32.mxu0 0.0
        %915 = vmatmul.mubr.f32.gmra.mrb[0].mxu0 %v789
        %v916 = vpop.f32.mrb[0].mxu0
        %v917 = vadd.f32 %v764, %v916
        %v918 = vpop.f32.mrb[0].mxu0
        %919 = vmatprep.mubr.f32.mxu0 0.0
        %920 = vmatmul.mubr.f32.gmra.mrb[0].mxu0 %v792
        %v921 = vpop.f32.mrb[0].mxu0
        %v922 = vadd.f32 %v764, %v921
        %v923 = vpop.f32.mrb[0].mxu0
        %924 = vmatprep.mubr.f32.mxu0 0.0
        %925 = vmatmul.mubr.f32.gmra.mrb[0].mxu0 %v795
        %v926 = vpop.f32.mrb[0].mxu0
        %v927 = vadd.f32 %v764, %v926
        %v928 = vpop.f32.mrb[0].mxu0
        %929 = vmatprep.mubr.f32.mxu0 0.0
        %930 = vmatmul.mubr.f32.gmra.mrb[0].mxu0 %v798
        %v931 = vpop.f32.mrb[0].mxu0
        %v932 = vadd.f32 %v764, %v931
        %v933 = vpop.f32.mrb[0].mxu0
        %934 = vmatprep.mubr.f32.mxu0 0.0
        %935 = vmatmul.mubr.f32.gmra.mrb[0].mxu0 %v801
        %v936 = vpop.f32.mrb[0].mxu0
        %v937 = vadd.f32 %v764, %v936
        %v938 = vpop.f32.mrb[0].mxu0
        %939 = vmatprep.mubr.f32.mxu0 0.0
        %940 = vmatmul.mubr.f32.gmra.mrb[0].mxu0 %v804
        %v941 = vpop.f32.mrb[0].mxu0
        %v942 = vadd.f32 %v764, %v941
        %v943 = vpop.f32.mrb[0].mxu0
        %944 = vmatprep.mubr.f32.mxu0 0.0
        %945 = vmatmul.mubr.f32.gmra.mrb[0].mxu0 %v807
        %v946 = vpop.f32.mrb[0].mxu0
        %v947 = vadd.f32 %v764, %v946
        %v948 = vpop.f32.mrb[0].mxu0
        %949 = vmatprep.mubr.f32.mxu0 0.0
        %950 = vmatmul.mubr.f32.gmra.mrb[0].mxu0 %v810
        %v951 = vpop.f32.mrb[0].mxu0
        %v952 = vadd.f32 %v764, %v951
        %v953 = vpop.f32.mrb[0].mxu0
        %954 = vmatprep.mubr.f32.mxu0 0.0
        %955 = vmatmul.mubr.f32.gmra.mrb[0].mxu0 %v813
        %v956 = vpop.f32.mrb[0].mxu0
        %v957 = vadd.f32 %v764, %v956
        %v958 = vpop.f32.mrb[0].mxu0
        %959 = vdwg.mxu0
        %v960 = vld [vmem:[%s365] sm:$0xff]
        %v961 = vld [vmem:[%s365 + $0x8] sm:$0xff]
        %v962 = vld [vmem:[%s365 + $0x10] sm:$0xff]
        %v963 = vld [vmem:[%s365 + $0x18] sm:$0xff]
        %v964 = vld [vmem:[%s365 + $0x20] sm:$0xff]
        %v965 = vld [vmem:[%s365 + $0x28] sm:$0xff]
        %v966 = vld [vmem:[%s365 + $0x30] sm:$0xff]
        %v967 = vld [vmem:[%s365 + $0x38] sm:$0xff]
        %v968 = vld [vmem:[%s365 + $0x40] sm:$0xff]
        %v969 = vld [vmem:[%s365 + $0x48] sm:$0xff]
        %v970 = vld [vmem:[%s365 + $0x50] sm:$0xff]
        %v971 = vld [vmem:[%s365 + $0x58] sm:$0xff]
        %v972 = vld [vmem:[%s365 + $0x60] sm:$0xff]
        %v973 = vld [vmem:[%s365 + $0x68] sm:$0xff]
        %v974 = vld [vmem:[%s365 + $0x70] sm:$0xff]
        %v975 = vld [vmem:[%s365 + $0x78] sm:$0xff]
        %v976 = vmul.f32 %v960, %v882
        %v977 = vmul.f32 %v961, %v887
        %v978 = vmul.f32 %v962, %v892
        %v979 = vmul.f32 %v963, %v897
        %v980 = vmul.f32 %v964, %v902
        %v981 = vmul.f32 %v965, %v907
        %v982 = vmul.f32 %v966, %v912
        %v983 = vmul.f32 %v967, %v917
        %v984 = vmul.f32 %v968, %v922
        %v985 = vmul.f32 %v969, %v927
        %v986 = vmul.f32 %v970, %v932
        %v987 = vmul.f32 %v971, %v937
        %v988 = vmul.f32 %v972, %v942
        %v989 = vmul.f32 %v973, %v947
        %v990 = vmul.f32 %v974, %v952
        %v991 = vmul.f32 %v975, %v957
        %v992 = vlaneseq
        %v993 = vshrl.u32 %v992, 7
        %v994 = vadd.s32 %v993, 8
        %v995 = vld [vmem:[%s346] sm:$0x1]
        %v996 = vlaneseq
        %v997 = vshrl.u32 %v996, 7
        %v998 = vsub.s32 0, %v997
        %v999 = vrot.slane %v995, %v998
        %vm1000 = vcmp.eq.s32.totalorder %v993, %v999
        %vm1001 = vcmp.eq.s32.totalorder %v994, %v999
        %v1002 = vsel %vm1000, 1, 0
        %v1003 = vsel %vm1001, 1, 0
        %v1004 = vcvt.s32.f32 %v1002
        %v1005 = vcvt.s32.f32 %v1003
        %v1006 = vld [vmem:[%s341] sm:$0xff]
        %v1007 = vld [vmem:[%s341 + $0x8] sm:$0xff]
        %1008 = vmatprep.subr.mxu0 0.0
        %1009 = vmatpush1.msra.mxu0 %v976
        %1010 = vmatprep.subr.mxu0 0.0
        %1011 = vmatpush1.msra.mxu0 %v977
        %1012 = vmatprep.subr.mxu0 0.0
        %1013 = vmatpush1.msra.mxu0 %v978
        %1014 = vmatprep.subr.mxu0 0.0
        %1015 = vmatpush1.msra.mxu0 %v979
        %1016 = vmatprep.subr.mxu0 0.0
        %1017 = vmatpush1.msra.mxu0 %v980
        %1018 = vmatprep.subr.mxu0 0.0
        %1019 = vmatpush1.msra.mxu0 %v981
        %1020 = vmatprep.subr.mxu0 0.0
        %1021 = vmatpush1.msra.mxu0 %v982
        %1022 = vmatprep.subr.mxu0 0.0
        %1023 = vmatpush1.msra.mxu0 %v983
        %1024 = vmatprep.subr.mxu0 0.0
        %1025 = vmatpush1.msra.mxu0 %v984
        %1026 = vmatprep.subr.mxu0 0.0
        %1027 = vmatpush1.msra.mxu0 %v985
        %1028 = vmatprep.subr.mxu0 0.0
        %1029 = vmatpush1.msra.mxu0 %v986
        %1030 = vmatprep.subr.mxu0 0.0
        %1031 = vmatpush1.msra.mxu0 %v987
        %1032 = vmatprep.subr.mxu0 0.0
        %1033 = vmatpush1.msra.mxu0 %v988
        %1034 = vmatprep.subr.mxu0 0.0
        %1035 = vmatpush1.msra.mxu0 %v989
        %1036 = vmatprep.subr.mxu0 0.0
        %1037 = vmatpush1.msra.mxu0 %v990
        %1038 = vmatprep.subr.mxu0 0.0
        %1039 = vmatpush1.msra.mxu0 %v991
        %1040 = vmatprep.subr.mxu0 0.0
        %1041 = vmatpush1.msra.mxu0 0.0
        %1042 = vmatprep.subr.mxu0 0.0
        %1043 = vmatpush1.msra.mxu0 0.0
        %1044 = vmatprep.subr.mxu0 0.0
        %1045 = vmatpush1.msra.mxu0 0.0
        %1046 = vmatprep.subr.mxu0 0.0
        %1047 = vmatpush1.msra.mxu0 0.0
        %1048 = vmatprep.subr.mxu0 0.0
        %1049 = vmatpush1.msra.mxu0 0.0
        %1050 = vmatprep.subr.mxu0 0.0
        %1051 = vmatpush1.msra.mxu0 0.0
        %1052 = vmatprep.subr.mxu0 0.0
        %1053 = vmatpush1.msra.mxu0 0.0
        %1054 = vmatprep.subr.mxu0 0.0
        %1055 = vmatpush1.msra.mxu0 0.0
        %1056 = vmatprep.subr.mxu0 0.0
        %1057 = vmatpush1.msra.mxu0 0.0
        %1058 = vmatprep.subr.mxu0 0.0
        %1059 = vmatpush1.msra.mxu0 0.0
        %1060 = vmatprep.subr.mxu0 0.0
        %1061 = vmatpush1.msra.mxu0 0.0
        %1062 = vmatprep.subr.mxu0 0.0
        %1063 = vmatpush1.msra.mxu0 0.0
        %1064 = vmatprep.subr.mxu0 0.0
        %1065 = vmatpush1.msra.mxu0 0.0
        %1066 = vmatprep.subr.mxu0 0.0
        %1067 = vmatpush1.msra.mxu0 0.0
        %1068 = vmatprep.subr.mxu0 0.0
        %1069 = vmatpush1.msra.mxu0 0.0
        %1070 = vmatprep.subr.mxu0 0.0
        %1071 = vmatpush1.msra.mxu0 0.0
        %1072 = vmatprep.mubr.f32.mxu0 0.0
        %1073 = vmatmul.mubr.f32.gmra.mrb[0].mxu0 %v1004
        %v1074 = vpop.f32.mrb[0].mxu0
        %v1075 = vadd.f32 0.0, %v1074
        %v1076 = vpop.f32.mrb[0].mxu0
        %1077 = vmatprep.mubr.f32.mxu0 0.0
        %1078 = vmatmul.mubr.f32.gmra.mrb[0].mxu0 %v1005
        %v1079 = vpop.f32.mrb[0].mxu0
        %v1080 = vadd.f32 0.0, %v1079
        %v1081 = vpop.f32.mrb[0].mxu0
        %1082 = vdwg.mxu0
        %v1083 = vadd.f32 %v1006, %v1075
        %v1084 = vadd.f32 %v1007, %v1080
        %1085 = vst.msk [vmem:[%s341] sm:$0xff] %vm766, %v1083
        %1086 = vst.msk [vmem:[%s341 + $0x8] sm:$0xff] %vm766, %v1084
        %s1087 = sand.u32 %s215, 1
        %s1088 = scalar_lea.sflag [#allocation3], %s1087
        %s1089 = sand.u32 %s215, 1
        %s1090 = smul.addr %s1089, 16
        %s1091 = scalar_lea.vmem [#allocation2], %s1090
        // Predicated region
        $region53: #{tpu_custom_call.1} parent=47 // pred_check
          %p1092 = pneg %p225
        $region54: #{tpu_custom_call.1} parent=47 // pred_check_branch
          %1094 = sbr.rel (%p1092) target = $region56
        $region55: #{tpu_custom_call.1} parent=47 // pred_region
          %s1096 = ssub.s32 256, 256
          %1097 = vsyncadd %s1088, %s1096
          %s1098 = smul.addr %s25, 2
          %s1099 = smul.addr %s1098, 128
          %s1100 = scalar_lea.hbm %s7, %s1099
          %s1101 = sshll.u32 %s1091, 4
          %s1102 = int_to_ptr.vmem [resolvable:$true] %s1101
          %1107 = dma.vmem_to_hbm [thread:$0]  %s1102, 256, %s1100, %s1088, 128, 128, 8
        $region56: #{tpu_custom_call.1} parent=47 // pred_fallthru
          _
      $region48: #{tpu_custom_call.1} parent=5 // pred_fallthru
        _
      %p1108 = scmp.le.s32.totalorder 2, %s16
      // Predicated region
      $region57: #{tpu_custom_call.1} parent=5 // pred_check
        %p1109 = pneg %p1108
      $region58: #{tpu_custom_call.1} parent=5 // pred_check_branch
        %1111 = sbr.rel (%p1109) target = $region60
      $region59: #{tpu_custom_call.1} parent=5 // pred_region
        %s1112 = ssub.s32 %s16, 2
        // Predicated region
        $region61: #{tpu_custom_call.1} parent=59 // pred_check
          %p1113 = pneg %p231
        $region62: #{tpu_custom_call.1} parent=59 // pred_check_branch
          %1115 = sbr.rel (%p1113) target = $region64
        $region63: #{tpu_custom_call.1} parent=59 // pred_region
          %s1116 = sand.u32 %s216, 1
          %s1117 = scalar_lea.sflag [#allocation3], %s1116
          %s1118 = sand.u32 %s216, 1
          %s1119 = smul.addr %s1118, 16
          %s1120 = scalar_lea.vmem [#allocation2], %s1119
          %1121 = dma.done %s1117, 256
        $region64: #{tpu_custom_call.1} parent=59 // pred_fallthru
          _
      $region60: #{tpu_custom_call.1} parent=5 // pred_fallthru
        _
    $region6: #{tpu_custom_call.1} parent=1 // loop_footer
      %s20 = sadd.s32 1, %s16
    $region7: #{tpu_custom_call.1} parent=1 // loop_footer_branch
      %15 = sbr.rel target = $region3
    $region8: #{tpu_custom_call.1} parent=1 // loop_exit
      _
    %1122 = vsyncpa [#allocation3], 1
    %s1123 = scalar_lea.sflag [#allocation3], 1
    %1124 = vsyncpa %s1123, 1

</llo_original>
